<compile_context>
chip_gen: v7x
topology: tpu7x:2x2x1
jax: 0.10.0
libtpu: 0.0.40
codegen_flags: <defaults>
</compile_context>

<pallas_src>
import jax
import jax.numpy as jnp
from jax import lax
from jax.experimental import pallas as pl
from jax.experimental.pallas import tpu as pltpu

# -------------------- config (small, consistent with the module) --------------------
EMBED_DIM   = 32   # embedding_dim
HIDDEN      = 32   # hidden_size
NUM_LAYERS  = 2    # num_layers
VOCAB       = 50   # vocab_size
NUM_CLASSES = 4    # num_classes
DROPOUT_P   = 0.5  # dropout (identity at inference)
BATCH       = 2    # NOTE: matmuls cost the same up to B=8 (f32 sublane tile); batch up
                   # for throughput. On v7x, a leading "parallel" batch-chunk grid axis
                   # would then shard sequences across the two TensorCores.
SEQ_LEN     = 8
OUT_PAD     = 128  # lane-dense logits width (sliced back to NUM_CLASSES in the wrapper)


# -------------------- Pallas kernel --------------------
def rnn_kernel(x_ref,      # (T, B, E)      full embedded sequence, time-major
               w_rnn_ref,  # (L, E+H, H)    fused [Wih^T; Whh^T] per layer
               b_rnn_ref,  # (L, 1, H)      fused bih + bhh per layer
               w1_ref,     # (H, 64)        fc1 weight (pre-transposed)
               b1_ref,     # (1, 64)
               w2_ref,     # (64, OUT_PAD)  fc2 weight (pre-transposed, zero-padded)
               b2_ref,     # (1, OUT_PAD)
               o_ref):     # (B, OUT_PAD)   padded logits (lane-dense store)
    T, B, _ = x_ref.shape

    # hidden state carried in registers; zero-initialized (matches h0 = zeros)
    h = [jnp.zeros((B, HIDDEN), jnp.float32) for _ in range(NUM_LAYERS)]

    inp = x_ref[0]  # placeholder init; overwritten at t=0
    for t in range(T):            # static unroll over time (T is small)
        inp = x_ref[t]            # (B, E)
        for l in range(NUM_LAYERS):
            # one fused matmul per layer: [x, h_prev] @ [Wih^T; Whh^T] + (bih+bhh)
            xh = jnp.concatenate([inp, h[l]], axis=-1)        # (B, E+H)
            pre = jnp.dot(xh, w_rnn_ref[l],
                          preferred_element_type=jnp.float32) + b_rnn_ref[l]
            h[l] = jnp.tanh(pre)
            inp = h[l]            # feed to next layer

    # classifier head on the last time step of the top layer (runs once, no pl.when)
    y = jnp.maximum(
        jnp.dot(inp, w1_ref[...], preferred_element_type=jnp.float32) + b1_ref[...],
        0.0)
    # TODO(synk): nn.Dropout is identity at inference time; not applied here.
    logits = jnp.dot(y, w2_ref[...], preferred_element_type=jnp.float32) + b2_ref[...]
    o_ref[...] = logits.astype(o_ref.dtype)   # full 128-lane unmasked store


def basic_rnn_forward(tokens, params):
    """tokens: (B, T) int32. Returns logits (B, NUM_CLASSES)."""
    emb, wih_t, whh_t, bih, bhh, w1_t, b1, w2_t, b2 = params
    B, T = tokens.shape

    # Embedding lookup (glue) then time-major layout for the kernel.
    x = emb[tokens]                       # (B, T, E)
    x_tm = jnp.transpose(x, (1, 0, 2))    # (T, B, E)

    # Fuse input->hidden and hidden->hidden along the contraction dim, and fuse biases.
    # (stacking Wih^T for all layers this way relies on EMBED_DIM == HIDDEN)
    w_rnn = jnp.concatenate([wih_t, whh_t], axis=1)   # (L, E+H, H)
    b_rnn = bih + bhh                                 # (L, 1, H)

    # Lane-dense head: pad fc2 to 128 output lanes; slice back after the call.
    w2_pad = jnp.zeros((w2_t.shape[0], OUT_PAD), jnp.float32).at[:, :NUM_CLASSES].set(w2_t)
    b2_pad = jnp.zeros((1, OUT_PAD), jnp.float32).at[:, :NUM_CLASSES].set(b2)

    vmem = pl.BlockSpec(memory_space=pltpu.MemorySpace.VMEM)
    out_padded = pl.pallas_call(
        rnn_kernel,
        out_shape=jax.ShapeDtypeStruct((B, OUT_PAD), jnp.float32),
        in_specs=[vmem] * 7,      # everything (<25 KB total) resident in VMEM, one call
        out_specs=vmem,
    )(x_tm, w_rnn, b_rnn, w1_t, b1, w2_pad, b2_pad)

    return out_padded[:, :NUM_CLASSES]


# -------------------- pure-JAX reference --------------------
def reference_forward(tokens, params):
    emb, wih_t, whh_t, bih, bhh, w1_t, b1, w2_t, b2 = params
    B, T = tokens.shape
    x = emb[tokens]                         # (B, T, E)
    xt = jnp.transpose(x, (1, 0, 2))        # (T, B, E)
    h0 = jnp.zeros((NUM_LAYERS, B, HIDDEN), jnp.float32)

    def step(h, x_t):
        inp = x_t
        new_h = []
        for l in range(NUM_LAYERS):
            hl = jnp.tanh(inp @ wih_t[l] + bih[l, 0] + h[l] @ whh_t[l] + bhh[l, 0])
            new_h.append(hl)
            inp = hl
        return jnp.stack(new_h), inp

    _, tops = lax.scan(step, h0, xt)        # tops: (T, B, H)
    last = tops[-1]                          # (B, H) == outputs[:, -1, :]
    y = jax.nn.relu(last @ w1_t + b1[0])
    return y @ w2_t + b2[0]


# -------------------- deterministic parameter init --------------------
def init_params(key):
    ks = jax.random.split(key, 12)
    s = 1.0 / jnp.sqrt(HIDDEN)
    emb = jax.random.normal(ks[0], (VOCAB, EMBED_DIM), jnp.float32)
    # RNN weights pre-transposed for the kernel: Wih^T (L,E,H), Whh^T (L,H,H).
    # (layer 0 input size == EMBED_DIM == HIDDEN, so a single stacked tensor works)
    wih_t = jax.random.uniform(ks[1], (NUM_LAYERS, EMBED_DIM, HIDDEN), jnp.float32, -s, s)
    whh_t = jax.random.uniform(ks[2], (NUM_LAYERS, HIDDEN, HIDDEN), jnp.float32, -s, s)
    bih   = jax.random.uniform(ks[3], (NUM_LAYERS, 1, HIDDEN), jnp.float32, -s, s)
    bhh   = jax.random.uniform(ks[4], (NUM_LAYERS, 1, HIDDEN), jnp.float32, -s, s)
    w1_t  = jax.random.uniform(ks[5], (HIDDEN, 64), jnp.float32, -s, s)
    b1    = jax.random.uniform(ks[6], (1, 64), jnp.float32, -s, s)
    s2 = 1.0 / jnp.sqrt(64.0)
    w2_t  = jax.random.uniform(ks[7], (64, NUM_CLASSES), jnp.float32, -s2, s2)
    b2    = jax.random.uniform(ks[8], (1, NUM_CLASSES), jnp.float32, -s2, s2)
    return (emb, wih_t, whh_t, bih, bhh, w1_t, b1, w2_t, b2)


if __name__ == "__main__":
    key = jax.random.PRNGKey(0)
    pkey, tkey = jax.random.split(key)
    params = init_params(pkey)
    tokens = jax.random.randint(tkey, (BATCH, SEQ_LEN), 0, VOCAB, dtype=jnp.int32)
    # seq_lengths unused by the reference forward (it always takes the last step).
    out = basic_rnn_forward(tokens, params)
    out = jax.block_until_ready(out)

    ref = jax.block_until_ready(reference_forward(tokens, params))
    assert out.shape == (BATCH, NUM_CLASSES)
    assert jnp.allclose(out, ref, atol=1e-5, rtol=1e-5), (out, ref)
    print("KERNEL_OK")
</pallas_src>

<mosaic_0001>
module attributes {stable_mosaic.version = 11 : i64} {
  func.func @rnn_kernel(%arg0: memref<8x2x32xf32, #tpu.memory_space<vmem>>, %arg1: memref<2x64x32xf32, #tpu.memory_space<vmem>>, %arg2: memref<2x1x32xf32, #tpu.memory_space<vmem>>, %arg3: memref<32x64xf32, #tpu.memory_space<vmem>>, %arg4: memref<1x64xf32, #tpu.memory_space<vmem>>, %arg5: memref<64x128xf32, #tpu.memory_space<vmem>>, %arg6: memref<1x128xf32, #tpu.memory_space<vmem>>, %arg7: memref<2x128xf32, #tpu.memory_space<vmem>>) attributes {dimension_semantics = [], scalar_prefetch = 0 : i64, scratch_operands = 0 : i64, tpu.core_type = #tpu.core_type<tc>} {
    %cst = arith.constant 0.000000e+00 : f32
    %0 = vector.broadcast %cst : f32 to vector<2x32xf32>
    %cst_0 = arith.constant 0.000000e+00 : f32
    %1 = vector.broadcast %cst_0 : f32 to vector<2x32xf32>
    %c0 = arith.constant 0 : index
    %c0_1 = arith.constant 0 : index
    %c0_2 = arith.constant 0 : index
    %2 = vector.load %arg0[%c0, %c0_1, %c0_2] : memref<8x2x32xf32, #tpu.memory_space<vmem>>, vector<1x2x32xf32>
    %3 = vector.shape_cast %2 : vector<1x2x32xf32> to vector<2x32xf32>
    %4 = tpu.concatenate %3, %0 in 1 : vector<2x32xf32>, vector<2x32xf32> -> vector<2x64xf32>
    %c0_3 = arith.constant 0 : index
    %c0_4 = arith.constant 0 : index
    %c0_5 = arith.constant 0 : index
    %5 = vector.load %arg1[%c0_3, %c0_4, %c0_5] : memref<2x64x32xf32, #tpu.memory_space<vmem>>, vector<1x64x32xf32>
    %6 = vector.shape_cast %5 : vector<1x64x32xf32> to vector<64x32xf32>
    %cst_6 = arith.constant dense<0.000000e+00> : vector<2x32xf32>
    %7 = tpu.matmul %4, %6, %cst_6 {dimension_numbers = #tpu.dot_dimension_numbers<[1], [0], [0], [1], [0, 0, 1, 1], [], []>} : vector<2x64xf32>, vector<64x32xf32>, vector<2x32xf32> -> vector<2x32xf32>
    %c0_7 = arith.constant 0 : index
    %c0_8 = arith.constant 0 : index
    %c0_9 = arith.constant 0 : index
    %8 = vector.load %arg2[%c0_7, %c0_8, %c0_9] : memref<2x1x32xf32, #tpu.memory_space<vmem>>, vector<1x1x32xf32>
    %9 = vector.shape_cast %8 : vector<1x1x32xf32> to vector<1x32xf32>
    %10 = vector.broadcast %9 : vector<1x32xf32> to vector<2x32xf32>
    %11 = arith.addf %7, %10 : vector<2x32xf32>
    %12 = math.tanh %11 : vector<2x32xf32>
    %13 = tpu.concatenate %12, %1 in 1 : vector<2x32xf32>, vector<2x32xf32> -> vector<2x64xf32>
    %c1 = arith.constant 1 : index
    %c0_10 = arith.constant 0 : index
    %c0_11 = arith.constant 0 : index
    %14 = vector.load %arg1[%c1, %c0_10, %c0_11] : memref<2x64x32xf32, #tpu.memory_space<vmem>>, vector<1x64x32xf32>
    %15 = vector.shape_cast %14 : vector<1x64x32xf32> to vector<64x32xf32>
    %cst_12 = arith.constant dense<0.000000e+00> : vector<2x32xf32>
    %16 = tpu.matmul %13, %15, %cst_12 {dimension_numbers = #tpu.dot_dimension_numbers<[1], [0], [0], [1], [0, 0, 1, 1], [], []>} : vector<2x64xf32>, vector<64x32xf32>, vector<2x32xf32> -> vector<2x32xf32>
    %c1_13 = arith.constant 1 : index
    %c0_14 = arith.constant 0 : index
    %c0_15 = arith.constant 0 : index
    %17 = vector.load %arg2[%c1_13, %c0_14, %c0_15] : memref<2x1x32xf32, #tpu.memory_space<vmem>>, vector<1x1x32xf32>
    %18 = vector.shape_cast %17 : vector<1x1x32xf32> to vector<1x32xf32>
    %19 = vector.broadcast %18 : vector<1x32xf32> to vector<2x32xf32>
    %20 = arith.addf %16, %19 : vector<2x32xf32>
    %21 = math.tanh %20 : vector<2x32xf32>
    %c1_16 = arith.constant 1 : index
    %c0_17 = arith.constant 0 : index
    %c0_18 = arith.constant 0 : index
    %22 = vector.load %arg0[%c1_16, %c0_17, %c0_18] : memref<8x2x32xf32, #tpu.memory_space<vmem>>, vector<1x2x32xf32>
    %23 = vector.shape_cast %22 : vector<1x2x32xf32> to vector<2x32xf32>
    %24 = tpu.concatenate %23, %12 in 1 : vector<2x32xf32>, vector<2x32xf32> -> vector<2x64xf32>
    %c0_19 = arith.constant 0 : index
    %c0_20 = arith.constant 0 : index
    %c0_21 = arith.constant 0 : index
    %25 = vector.load %arg1[%c0_19, %c0_20, %c0_21] : memref<2x64x32xf32, #tpu.memory_space<vmem>>, vector<1x64x32xf32>
    %26 = vector.shape_cast %25 : vector<1x64x32xf32> to vector<64x32xf32>
    %cst_22 = arith.constant dense<0.000000e+00> : vector<2x32xf32>
    %27 = tpu.matmul %24, %26, %cst_22 {dimension_numbers = #tpu.dot_dimension_numbers<[1], [0], [0], [1], [0, 0, 1, 1], [], []>} : vector<2x64xf32>, vector<64x32xf32>, vector<2x32xf32> -> vector<2x32xf32>
    %c0_23 = arith.constant 0 : index
    %c0_24 = arith.constant 0 : index
    %c0_25 = arith.constant 0 : index
    %28 = vector.load %arg2[%c0_23, %c0_24, %c0_25] : memref<2x1x32xf32, #tpu.memory_space<vmem>>, vector<1x1x32xf32>
    %29 = vector.shape_cast %28 : vector<1x1x32xf32> to vector<1x32xf32>
    %30 = vector.broadcast %29 : vector<1x32xf32> to vector<2x32xf32>
    %31 = arith.addf %27, %30 : vector<2x32xf32>
    %32 = math.tanh %31 : vector<2x32xf32>
    %33 = tpu.concatenate %32, %21 in 1 : vector<2x32xf32>, vector<2x32xf32> -> vector<2x64xf32>
    %c1_26 = arith.constant 1 : index
    %c0_27 = arith.constant 0 : index
    %c0_28 = arith.constant 0 : index
    %34 = vector.load %arg1[%c1_26, %c0_27, %c0_28] : memref<2x64x32xf32, #tpu.memory_space<vmem>>, vector<1x64x32xf32>
    %35 = vector.shape_cast %34 : vector<1x64x32xf32> to vector<64x32xf32>
    %cst_29 = arith.constant dense<0.000000e+00> : vector<2x32xf32>
    %36 = tpu.matmul %33, %35, %cst_29 {dimension_numbers = #tpu.dot_dimension_numbers<[1], [0], [0], [1], [0, 0, 1, 1], [], []>} : vector<2x64xf32>, vector<64x32xf32>, vector<2x32xf32> -> vector<2x32xf32>
    %c1_30 = arith.constant 1 : index
    %c0_31 = arith.constant 0 : index
    %c0_32 = arith.constant 0 : index
    %37 = vector.load %arg2[%c1_30, %c0_31, %c0_32] : memref<2x1x32xf32, #tpu.memory_space<vmem>>, vector<1x1x32xf32>
    %38 = vector.shape_cast %37 : vector<1x1x32xf32> to vector<1x32xf32>
    %39 = vector.broadcast %38 : vector<1x32xf32> to vector<2x32xf32>
    %40 = arith.addf %36, %39 : vector<2x32xf32>
    %41 = math.tanh %40 : vector<2x32xf32>
    %c2 = arith.constant 2 : index
    %c0_33 = arith.constant 0 : index
    %c0_34 = arith.constant 0 : index
    %42 = vector.load %arg0[%c2, %c0_33, %c0_34] : memref<8x2x32xf32, #tpu.memory_space<vmem>>, vector<1x2x32xf32>
    %43 = vector.shape_cast %42 : vector<1x2x32xf32> to vector<2x32xf32>
    %44 = tpu.concatenate %43, %32 in 1 : vector<2x32xf32>, vector<2x32xf32> -> vector<2x64xf32>
    %c0_35 = arith.constant 0 : index
    %c0_36 = arith.constant 0 : index
    %c0_37 = arith.constant 0 : index
    %45 = vector.load %arg1[%c0_35, %c0_36, %c0_37] : memref<2x64x32xf32, #tpu.memory_space<vmem>>, vector<1x64x32xf32>
    %46 = vector.shape_cast %45 : vector<1x64x32xf32> to vector<64x32xf32>
    %cst_38 = arith.constant dense<0.000000e+00> : vector<2x32xf32>
    %47 = tpu.matmul %44, %46, %cst_38 {dimension_numbers = #tpu.dot_dimension_numbers<[1], [0], [0], [1], [0, 0, 1, 1], [], []>} : vector<2x64xf32>, vector<64x32xf32>, vector<2x32xf32> -> vector<2x32xf32>
    %c0_39 = arith.constant 0 : index
    %c0_40 = arith.constant 0 : index
    %c0_41 = arith.constant 0 : index
    %48 = vector.load %arg2[%c0_39, %c0_40, %c0_41] : memref<2x1x32xf32, #tpu.memory_space<vmem>>, vector<1x1x32xf32>
    %49 = vector.shape_cast %48 : vector<1x1x32xf32> to vector<1x32xf32>
    %50 = vector.broadcast %49 : vector<1x32xf32> to vector<2x32xf32>
    %51 = arith.addf %47, %50 : vector<2x32xf32>
    %52 = math.tanh %51 : vector<2x32xf32>
    %53 = tpu.concatenate %52, %41 in 1 : vector<2x32xf32>, vector<2x32xf32> -> vector<2x64xf32>
    %c1_42 = arith.constant 1 : index
    %c0_43 = arith.constant 0 : index
    %c0_44 = arith.constant 0 : index
    %54 = vector.load %arg1[%c1_42, %c0_43, %c0_44] : memref<2x64x32xf32, #tpu.memory_space<vmem>>, vector<1x64x32xf32>
    %55 = vector.shape_cast %54 : vector<1x64x32xf32> to vector<64x32xf32>
    %cst_45 = arith.constant dense<0.000000e+00> : vector<2x32xf32>
    %56 = tpu.matmul %53, %55, %cst_45 {dimension_numbers = #tpu.dot_dimension_numbers<[1], [0], [0], [1], [0, 0, 1, 1], [], []>} : vector<2x64xf32>, vector<64x32xf32>, vector<2x32xf32> -> vector<2x32xf32>
    %c1_46 = arith.constant 1 : index
    %c0_47 = arith.constant 0 : index
    %c0_48 = arith.constant 0 : index
    %57 = vector.load %arg2[%c1_46, %c0_47, %c0_48] : memref<2x1x32xf32, #tpu.memory_space<vmem>>, vector<1x1x32xf32>
    %58 = vector.shape_cast %57 : vector<1x1x32xf32> to vector<1x32xf32>
    %59 = vector.broadcast %58 : vector<1x32xf32> to vector<2x32xf32>
    %60 = arith.addf %56, %59 : vector<2x32xf32>
    %61 = math.tanh %60 : vector<2x32xf32>
    %c3 = arith.constant 3 : index
    %c0_49 = arith.constant 0 : index
    %c0_50 = arith.constant 0 : index
    %62 = vector.load %arg0[%c3, %c0_49, %c0_50] : memref<8x2x32xf32, #tpu.memory_space<vmem>>, vector<1x2x32xf32>
    %63 = vector.shape_cast %62 : vector<1x2x32xf32> to vector<2x32xf32>
    %64 = tpu.concatenate %63, %52 in 1 : vector<2x32xf32>, vector<2x32xf32> -> vector<2x64xf32>
    %c0_51 = arith.constant 0 : index
    %c0_52 = arith.constant 0 : index
    %c0_53 = arith.constant 0 : index
    %65 = vector.load %arg1[%c0_51, %c0_52, %c0_53] : memref<2x64x32xf32, #tpu.memory_space<vmem>>, vector<1x64x32xf32>
    %66 = vector.shape_cast %65 : vector<1x64x32xf32> to vector<64x32xf32>
    %cst_54 = arith.constant dense<0.000000e+00> : vector<2x32xf32>
    %67 = tpu.matmul %64, %66, %cst_54 {dimension_numbers = #tpu.dot_dimension_numbers<[1], [0], [0], [1], [0, 0, 1, 1], [], []>} : vector<2x64xf32>, vector<64x32xf32>, vector<2x32xf32> -> vector<2x32xf32>
    %c0_55 = arith.constant 0 : index
    %c0_56 = arith.constant 0 : index
    %c0_57 = arith.constant 0 : index
    %68 = vector.load %arg2[%c0_55, %c0_56, %c0_57] : memref<2x1x32xf32, #tpu.memory_space<vmem>>, vector<1x1x32xf32>
    %69 = vector.shape_cast %68 : vector<1x1x32xf32> to vector<1x32xf32>
    %70 = vector.broadcast %69 : vector<1x32xf32> to vector<2x32xf32>
    %71 = arith.addf %67, %70 : vector<2x32xf32>
    %72 = math.tanh %71 : vector<2x32xf32>
    %73 = tpu.concatenate %72, %61 in 1 : vector<2x32xf32>, vector<2x32xf32> -> vector<2x64xf32>
    %c1_58 = arith.constant 1 : index
    %c0_59 = arith.constant 0 : index
    %c0_60 = arith.constant 0 : index
    %74 = vector.load %arg1[%c1_58, %c0_59, %c0_60] : memref<2x64x32xf32, #tpu.memory_space<vmem>>, vector<1x64x32xf32>
    %75 = vector.shape_cast %74 : vector<1x64x32xf32> to vector<64x32xf32>
    %cst_61 = arith.constant dense<0.000000e+00> : vector<2x32xf32>
    %76 = tpu.matmul %73, %75, %cst_61 {dimension_numbers = #tpu.dot_dimension_numbers<[1], [0], [0], [1], [0, 0, 1, 1], [], []>} : vector<2x64xf32>, vector<64x32xf32>, vector<2x32xf32> -> vector<2x32xf32>
    %c1_62 = arith.constant 1 : index
    %c0_63 = arith.constant 0 : index
    %c0_64 = arith.constant 0 : index
    %77 = vector.load %arg2[%c1_62, %c0_63, %c0_64] : memref<2x1x32xf32, #tpu.memory_space<vmem>>, vector<1x1x32xf32>
    %78 = vector.shape_cast %77 : vector<1x1x32xf32> to vector<1x32xf32>
    %79 = vector.broadcast %78 : vector<1x32xf32> to vector<2x32xf32>
    %80 = arith.addf %76, %79 : vector<2x32xf32>
    %81 = math.tanh %80 : vector<2x32xf32>
    %c4 = arith.constant 4 : index
    %c0_65 = arith.constant 0 : index
    %c0_66 = arith.constant 0 : index
    %82 = vector.load %arg0[%c4, %c0_65, %c0_66] : memref<8x2x32xf32, #tpu.memory_space<vmem>>, vector<1x2x32xf32>
    %83 = vector.shape_cast %82 : vector<1x2x32xf32> to vector<2x32xf32>
    %84 = tpu.concatenate %83, %72 in 1 : vector<2x32xf32>, vector<2x32xf32> -> vector<2x64xf32>
    %c0_67 = arith.constant 0 : index
    %c0_68 = arith.constant 0 : index
    %c0_69 = arith.constant 0 : index
    %85 = vector.load %arg1[%c0_67, %c0_68, %c0_69] : memref<2x64x32xf32, #tpu.memory_space<vmem>>, vector<1x64x32xf32>
    %86 = vector.shape_cast %85 : vector<1x64x32xf32> to vector<64x32xf32>
    %cst_70 = arith.constant dense<0.000000e+00> : vector<2x32xf32>
    %87 = tpu.matmul %84, %86, %cst_70 {dimension_numbers = #tpu.dot_dimension_numbers<[1], [0], [0], [1], [0, 0, 1, 1], [], []>} : vector<2x64xf32>, vector<64x32xf32>, vector<2x32xf32> -> vector<2x32xf32>
    %c0_71 = arith.constant 0 : index
    %c0_72 = arith.constant 0 : index
    %c0_73 = arith.constant 0 : index
    %88 = vector.load %arg2[%c0_71, %c0_72, %c0_73] : memref<2x1x32xf32, #tpu.memory_space<vmem>>, vector<1x1x32xf32>
    %89 = vector.shape_cast %88 : vector<1x1x32xf32> to vector<1x32xf32>
    %90 = vector.broadcast %89 : vector<1x32xf32> to vector<2x32xf32>
    %91 = arith.addf %87, %90 : vector<2x32xf32>
    %92 = math.tanh %91 : vector<2x32xf32>
    %93 = tpu.concatenate %92, %81 in 1 : vector<2x32xf32>, vector<2x32xf32> -> vector<2x64xf32>
    %c1_74 = arith.constant 1 : index
    %c0_75 = arith.constant 0 : index
    %c0_76 = arith.constant 0 : index
    %94 = vector.load %arg1[%c1_74, %c0_75, %c0_76] : memref<2x64x32xf32, #tpu.memory_space<vmem>>, vector<1x64x32xf32>
    %95 = vector.shape_cast %94 : vector<1x64x32xf32> to vector<64x32xf32>
    %cst_77 = arith.constant dense<0.000000e+00> : vector<2x32xf32>
    %96 = tpu.matmul %93, %95, %cst_77 {dimension_numbers = #tpu.dot_dimension_numbers<[1], [0], [0], [1], [0, 0, 1, 1], [], []>} : vector<2x64xf32>, vector<64x32xf32>, vector<2x32xf32> -> vector<2x32xf32>
    %c1_78 = arith.constant 1 : index
    %c0_79 = arith.constant 0 : index
    %c0_80 = arith.constant 0 : index
    %97 = vector.load %arg2[%c1_78, %c0_79, %c0_80] : memref<2x1x32xf32, #tpu.memory_space<vmem>>, vector<1x1x32xf32>
    %98 = vector.shape_cast %97 : vector<1x1x32xf32> to vector<1x32xf32>
    %99 = vector.broadcast %98 : vector<1x32xf32> to vector<2x32xf32>
    %100 = arith.addf %96, %99 : vector<2x32xf32>
    %101 = math.tanh %100 : vector<2x32xf32>
    %c5 = arith.constant 5 : index
    %c0_81 = arith.constant 0 : index
    %c0_82 = arith.constant 0 : index
    %102 = vector.load %arg0[%c5, %c0_81, %c0_82] : memref<8x2x32xf32, #tpu.memory_space<vmem>>, vector<1x2x32xf32>
    %103 = vector.shape_cast %102 : vector<1x2x32xf32> to vector<2x32xf32>
    %104 = tpu.concatenate %103, %92 in 1 : vector<2x32xf32>, vector<2x32xf32> -> vector<2x64xf32>
    %c0_83 = arith.constant 0 : index
    %c0_84 = arith.constant 0 : index
    %c0_85 = arith.constant 0 : index
    %105 = vector.load %arg1[%c0_83, %c0_84, %c0_85] : memref<2x64x32xf32, #tpu.memory_space<vmem>>, vector<1x64x32xf32>
    %106 = vector.shape_cast %105 : vector<1x64x32xf32> to vector<64x32xf32>
    %cst_86 = arith.constant dense<0.000000e+00> : vector<2x32xf32>
    %107 = tpu.matmul %104, %106, %cst_86 {dimension_numbers = #tpu.dot_dimension_numbers<[1], [0], [0], [1], [0, 0, 1, 1], [], []>} : vector<2x64xf32>, vector<64x32xf32>, vector<2x32xf32> -> vector<2x32xf32>
    %c0_87 = arith.constant 0 : index
    %c0_88 = arith.constant 0 : index
    %c0_89 = arith.constant 0 : index
    %108 = vector.load %arg2[%c0_87, %c0_88, %c0_89] : memref<2x1x32xf32, #tpu.memory_space<vmem>>, vector<1x1x32xf32>
    %109 = vector.shape_cast %108 : vector<1x1x32xf32> to vector<1x32xf32>
    %110 = vector.broadcast %109 : vector<1x32xf32> to vector<2x32xf32>
    %111 = arith.addf %107, %110 : vector<2x32xf32>
    %112 = math.tanh %111 : vector<2x32xf32>
    %113 = tpu.concatenate %112, %101 in 1 : vector<2x32xf32>, vector<2x32xf32> -> vector<2x64xf32>
    %c1_90 = arith.constant 1 : index
    %c0_91 = arith.constant 0 : index
    %c0_92 = arith.constant 0 : index
    %114 = vector.load %arg1[%c1_90, %c0_91, %c0_92] : memref<2x64x32xf32, #tpu.memory_space<vmem>>, vector<1x64x32xf32>
    %115 = vector.shape_cast %114 : vector<1x64x32xf32> to vector<64x32xf32>
    %cst_93 = arith.constant dense<0.000000e+00> : vector<2x32xf32>
    %116 = tpu.matmul %113, %115, %cst_93 {dimension_numbers = #tpu.dot_dimension_numbers<[1], [0], [0], [1], [0, 0, 1, 1], [], []>} : vector<2x64xf32>, vector<64x32xf32>, vector<2x32xf32> -> vector<2x32xf32>
    %c1_94 = arith.constant 1 : index
    %c0_95 = arith.constant 0 : index
    %c0_96 = arith.constant 0 : index
    %117 = vector.load %arg2[%c1_94, %c0_95, %c0_96] : memref<2x1x32xf32, #tpu.memory_space<vmem>>, vector<1x1x32xf32>
    %118 = vector.shape_cast %117 : vector<1x1x32xf32> to vector<1x32xf32>
    %119 = vector.broadcast %118 : vector<1x32xf32> to vector<2x32xf32>
    %120 = arith.addf %116, %119 : vector<2x32xf32>
    %121 = math.tanh %120 : vector<2x32xf32>
    %c6 = arith.constant 6 : index
    %c0_97 = arith.constant 0 : index
    %c0_98 = arith.constant 0 : index
    %122 = vector.load %arg0[%c6, %c0_97, %c0_98] : memref<8x2x32xf32, #tpu.memory_space<vmem>>, vector<1x2x32xf32>
    %123 = vector.shape_cast %122 : vector<1x2x32xf32> to vector<2x32xf32>
    %124 = tpu.concatenate %123, %112 in 1 : vector<2x32xf32>, vector<2x32xf32> -> vector<2x64xf32>
    %c0_99 = arith.constant 0 : index
    %c0_100 = arith.constant 0 : index
    %c0_101 = arith.constant 0 : index
    %125 = vector.load %arg1[%c0_99, %c0_100, %c0_101] : memref<2x64x32xf32, #tpu.memory_space<vmem>>, vector<1x64x32xf32>
    %126 = vector.shape_cast %125 : vector<1x64x32xf32> to vector<64x32xf32>
    %cst_102 = arith.constant dense<0.000000e+00> : vector<2x32xf32>
    %127 = tpu.matmul %124, %126, %cst_102 {dimension_numbers = #tpu.dot_dimension_numbers<[1], [0], [0], [1], [0, 0, 1, 1], [], []>} : vector<2x64xf32>, vector<64x32xf32>, vector<2x32xf32> -> vector<2x32xf32>
    %c0_103 = arith.constant 0 : index
    %c0_104 = arith.constant 0 : index
    %c0_105 = arith.constant 0 : index
    %128 = vector.load %arg2[%c0_103, %c0_104, %c0_105] : memref<2x1x32xf32, #tpu.memory_space<vmem>>, vector<1x1x32xf32>
    %129 = vector.shape_cast %128 : vector<1x1x32xf32> to vector<1x32xf32>
    %130 = vector.broadcast %129 : vector<1x32xf32> to vector<2x32xf32>
    %131 = arith.addf %127, %130 : vector<2x32xf32>
    %132 = math.tanh %131 : vector<2x32xf32>
    %133 = tpu.concatenate %132, %121 in 1 : vector<2x32xf32>, vector<2x32xf32> -> vector<2x64xf32>
    %c1_106 = arith.constant 1 : index
    %c0_107 = arith.constant 0 : index
    %c0_108 = arith.constant 0 : index
    %134 = vector.load %arg1[%c1_106, %c0_107, %c0_108] : memref<2x64x32xf32, #tpu.memory_space<vmem>>, vector<1x64x32xf32>
    %135 = vector.shape_cast %134 : vector<1x64x32xf32> to vector<64x32xf32>
    %cst_109 = arith.constant dense<0.000000e+00> : vector<2x32xf32>
    %136 = tpu.matmul %133, %135, %cst_109 {dimension_numbers = #tpu.dot_dimension_numbers<[1], [0], [0], [1], [0, 0, 1, 1], [], []>} : vector<2x64xf32>, vector<64x32xf32>, vector<2x32xf32> -> vector<2x32xf32>
    %c1_110 = arith.constant 1 : index
    %c0_111 = arith.constant 0 : index
    %c0_112 = arith.constant 0 : index
    %137 = vector.load %arg2[%c1_110, %c0_111, %c0_112] : memref<2x1x32xf32, #tpu.memory_space<vmem>>, vector<1x1x32xf32>
    %138 = vector.shape_cast %137 : vector<1x1x32xf32> to vector<1x32xf32>
    %139 = vector.broadcast %138 : vector<1x32xf32> to vector<2x32xf32>
    %140 = arith.addf %136, %139 : vector<2x32xf32>
    %141 = math.tanh %140 : vector<2x32xf32>
    %c7 = arith.constant 7 : index
    %c0_113 = arith.constant 0 : index
    %c0_114 = arith.constant 0 : index
    %142 = vector.load %arg0[%c7, %c0_113, %c0_114] : memref<8x2x32xf32, #tpu.memory_space<vmem>>, vector<1x2x32xf32>
    %143 = vector.shape_cast %142 : vector<1x2x32xf32> to vector<2x32xf32>
    %144 = tpu.concatenate %143, %132 in 1 : vector<2x32xf32>, vector<2x32xf32> -> vector<2x64xf32>
    %c0_115 = arith.constant 0 : index
    %c0_116 = arith.constant 0 : index
    %c0_117 = arith.constant 0 : index
    %145 = vector.load %arg1[%c0_115, %c0_116, %c0_117] : memref<2x64x32xf32, #tpu.memory_space<vmem>>, vector<1x64x32xf32>
    %146 = vector.shape_cast %145 : vector<1x64x32xf32> to vector<64x32xf32>
    %cst_118 = arith.constant dense<0.000000e+00> : vector<2x32xf32>
    %147 = tpu.matmul %144, %146, %cst_118 {dimension_numbers = #tpu.dot_dimension_numbers<[1], [0], [0], [1], [0, 0, 1, 1], [], []>} : vector<2x64xf32>, vector<64x32xf32>, vector<2x32xf32> -> vector<2x32xf32>
    %c0_119 = arith.constant 0 : index
    %c0_120 = arith.constant 0 : index
    %c0_121 = arith.constant 0 : index
    %148 = vector.load %arg2[%c0_119, %c0_120, %c0_121] : memref<2x1x32xf32, #tpu.memory_space<vmem>>, vector<1x1x32xf32>
    %149 = vector.shape_cast %148 : vector<1x1x32xf32> to vector<1x32xf32>
    %150 = vector.broadcast %149 : vector<1x32xf32> to vector<2x32xf32>
    %151 = arith.addf %147, %150 : vector<2x32xf32>
    %152 = math.tanh %151 : vector<2x32xf32>
    %153 = tpu.concatenate %152, %141 in 1 : vector<2x32xf32>, vector<2x32xf32> -> vector<2x64xf32>
    %c1_122 = arith.constant 1 : index
    %c0_123 = arith.constant 0 : index
    %c0_124 = arith.constant 0 : index
    %154 = vector.load %arg1[%c1_122, %c0_123, %c0_124] : memref<2x64x32xf32, #tpu.memory_space<vmem>>, vector<1x64x32xf32>
    %155 = vector.shape_cast %154 : vector<1x64x32xf32> to vector<64x32xf32>
    %cst_125 = arith.constant dense<0.000000e+00> : vector<2x32xf32>
    %156 = tpu.matmul %153, %155, %cst_125 {dimension_numbers = #tpu.dot_dimension_numbers<[1], [0], [0], [1], [0, 0, 1, 1], [], []>} : vector<2x64xf32>, vector<64x32xf32>, vector<2x32xf32> -> vector<2x32xf32>
    %c1_126 = arith.constant 1 : index
    %c0_127 = arith.constant 0 : index
    %c0_128 = arith.constant 0 : index
    %157 = vector.load %arg2[%c1_126, %c0_127, %c0_128] : memref<2x1x32xf32, #tpu.memory_space<vmem>>, vector<1x1x32xf32>
    %158 = vector.shape_cast %157 : vector<1x1x32xf32> to vector<1x32xf32>
    %159 = vector.broadcast %158 : vector<1x32xf32> to vector<2x32xf32>
    %160 = arith.addf %156, %159 : vector<2x32xf32>
    %161 = math.tanh %160 : vector<2x32xf32>
    %c0_129 = arith.constant 0 : index
    %c0_130 = arith.constant 0 : index
    %162 = vector.load %arg3[%c0_129, %c0_130] : memref<32x64xf32, #tpu.memory_space<vmem>>, vector<32x64xf32>
    %cst_131 = arith.constant dense<0.000000e+00> : vector<2x64xf32>
    %163 = tpu.matmul %161, %162, %cst_131 {dimension_numbers = #tpu.dot_dimension_numbers<[1], [0], [0], [1], [0, 0, 1, 1], [], []>} : vector<2x32xf32>, vector<32x64xf32>, vector<2x64xf32> -> vector<2x64xf32>
    %c0_132 = arith.constant 0 : index
    %c0_133 = arith.constant 0 : index
    %164 = vector.load %arg4[%c0_132, %c0_133] : memref<1x64xf32, #tpu.memory_space<vmem>>, vector<1x64xf32>
    %165 = vector.broadcast %164 : vector<1x64xf32> to vector<2x64xf32>
    %166 = arith.addf %163, %165 : vector<2x64xf32>
    %cst_134 = arith.constant 0.000000e+00 : f32
    %167 = vector.broadcast %cst_134 : f32 to vector<2x64xf32>
    %168 = arith.maximumf %166, %167 : vector<2x64xf32>
    %c0_135 = arith.constant 0 : index
    %c0_136 = arith.constant 0 : index
    %169 = vector.load %arg5[%c0_135, %c0_136] : memref<64x128xf32, #tpu.memory_space<vmem>>, vector<64x128xf32>
    %cst_137 = arith.constant dense<0.000000e+00> : vector<2x128xf32>
    %170 = tpu.matmul %168, %169, %cst_137 {dimension_numbers = #tpu.dot_dimension_numbers<[1], [0], [0], [1], [0, 0, 1, 1], [], []>} : vector<2x64xf32>, vector<64x128xf32>, vector<2x128xf32> -> vector<2x128xf32>
    %c0_138 = arith.constant 0 : index
    %c0_139 = arith.constant 0 : index
    %171 = vector.load %arg6[%c0_138, %c0_139] : memref<1x128xf32, #tpu.memory_space<vmem>>, vector<1x128xf32>
    %172 = vector.broadcast %171 : vector<1x128xf32> to vector<2x128xf32>
    %173 = arith.addf %170, %172 : vector<2x128xf32>
    %c0_140 = arith.constant 0 : index
    %c0_141 = arith.constant 0 : index
    %174 = vector.load %arg7[%c0_140, %c0_141] : memref<2x128xf32, #tpu.memory_space<vmem>>, vector<2x128xf32>
    tpu.vector_store %arg7[%c0_140, %c0_141], %173 {strides = array<i32>} : memref<2x128xf32, #tpu.memory_space<vmem>>, vector<2x128xf32>,
    return
  }
}

</mosaic_0001>

<llo_original>
// kernel: tpu_custom_call.1
$region0: #{tpu_custom_call.1}
  #allocation0 [shape = 'u32[]', space=smem, size = 0x4, offset = 0x4, fixed_abs, tag = 'smem constant byte address 0x4 - core index']
  #allocation1 [shape = 'u32[144,128]{1,0:T(1,128)}', space=vmem, size = 0x12000, scoped, tag = 'internal scratch']
  %s0 = inlined_call_operand.vmem [shape: f32[8,2,32], index: 0, kind: input, shape index: {}]
  %s1 = inlined_call_operand.vmem [shape: f32[2,64,32], index: 1, kind: input, shape index: {}]
  %s2 = inlined_call_operand.vmem [shape: f32[2,1,32], index: 2, kind: input, shape index: {}]
  %s3 = inlined_call_operand.vmem [shape: f32[32,64], index: 3, kind: input, shape index: {}]
  %s4 = inlined_call_operand.vmem [shape: f32[1,64], index: 4, kind: input, shape index: {}]
  %s5 = inlined_call_operand.vmem [shape: f32[64,128], index: 5, kind: input, shape index: {}]
  %s6 = inlined_call_operand.vmem [shape: f32[1,128], index: 6, kind: input, shape index: {}]
  %s7 = inlined_call_operand.hbm [shape: f32[2,128], index: 7, kind: output, shape index: {}]
  %s8 = sld [smem:[#allocation0]]
  $region38: #{tpu_custom_call.1} parent=0
    _
  %s10 = ssub.s32 1, %s8
  %s11 = scalar_select 0, %s10, %s8
  $region1: #{tpu_custom_call.1} parent=0
    #allocation2 [shape = 'u8[1024]{0}', space=vmem, size = 0x400, scoped, tag = 'output window, operand 0, single buffered']
    #allocation3 [shape = 's32[1]{0}', space=sflag, size = 0x4, scoped, tag = 'scoped memory for tpu_custom_call.1']
    %12 = vsyncpa [#allocation3], 0
    // Predicated region
    $region2: #{tpu_custom_call.1} parent=1 // pred_check
      _
    $region3: #{tpu_custom_call.1} parent=1 // pred_check_branch
      %14 = sbr.rel (0) target = $region5
    $region4: #{tpu_custom_call.1} parent=1 // pred_region
      _
    $region5: #{tpu_custom_call.1} parent=1 // pred_fallthru
      _
    // Predicated region
    $region6: #{tpu_custom_call.1} parent=1 // pred_check
      _
    $region7: #{tpu_custom_call.1} parent=1 // pred_check_branch
      %16 = sbr.rel (0) target = $region9
    $region8: #{tpu_custom_call.1} parent=1 // pred_region
      _
    $region9: #{tpu_custom_call.1} parent=1 // pred_fallthru
      _
    // Predicated region
    $region10: #{tpu_custom_call.1} parent=1 // pred_check
      _
    $region11: #{tpu_custom_call.1} parent=1 // pred_check_branch
      %18 = sbr.rel (0) target = $region13
    $region12: #{tpu_custom_call.1} parent=1 // pred_region
      _
    $region13: #{tpu_custom_call.1} parent=1 // pred_fallthru
      _
    // Predicated region
    $region14: #{tpu_custom_call.1} parent=1 // pred_check
      _
    $region15: #{tpu_custom_call.1} parent=1 // pred_check_branch
      %20 = sbr.rel (0) target = $region17
    $region16: #{tpu_custom_call.1} parent=1 // pred_region
      _
    $region17: #{tpu_custom_call.1} parent=1 // pred_fallthru
      _
    // Predicated region
    $region18: #{tpu_custom_call.1} parent=1 // pred_check
      _
    $region19: #{tpu_custom_call.1} parent=1 // pred_check_branch
      %22 = sbr.rel (0) target = $region21
    $region20: #{tpu_custom_call.1} parent=1 // pred_region
      _
    $region21: #{tpu_custom_call.1} parent=1 // pred_fallthru
      _
    // Predicated region
    $region22: #{tpu_custom_call.1} parent=1 // pred_check
      _
    $region23: #{tpu_custom_call.1} parent=1 // pred_check_branch
      %24 = sbr.rel (0) target = $region25
    $region24: #{tpu_custom_call.1} parent=1 // pred_region
      _
    $region25: #{tpu_custom_call.1} parent=1 // pred_fallthru
      _
    // Predicated region
    $region26: #{tpu_custom_call.1} parent=1 // pred_check
      _
    $region27: #{tpu_custom_call.1} parent=1 // pred_check_branch
      %26 = sbr.rel (0) target = $region29
    $region28: #{tpu_custom_call.1} parent=1 // pred_region
      _
    $region29: #{tpu_custom_call.1} parent=1 // pred_fallthru
      _
    %v27 = vld [vmem:[%s0] sm:$0x3]
    %vm28 = vcmask 261120
    %v29 = vsel %vm28, %v27, 0.0
    %v30 = vld [vmem:[%s1] sm:$0xff]
    %v31 = vld [vmem:[%s1 + $0x8] sm:$0xff]
    %v32 = vld [vmem:[%s1 + $0x10] sm:$0xff]
    %v33 = vld [vmem:[%s1 + $0x18] sm:$0xff]
    %v34 = vld [vmem:[%s1 + $0x20] sm:$0xff]
    %v35 = vld [vmem:[%s1 + $0x28] sm:$0xff]
    %v36 = vld [vmem:[%s1 + $0x30] sm:$0xff]
    %v37 = vld [vmem:[%s1 + $0x38] sm:$0xff]
    %v38 = vld [vmem:[%s2] sm:$0x1]
    %v40 = vlaneseq
    %v41 = vshrl.u32 %v40, 7
    %v42 = vsub.s32 0, %v41
    %v43 = vrot.slane %v38, %v42
    %vm45 = vcmask 523264
    %v47 = vsel %vm45, %v29, 0
    %49 = vmatprep.subr.mxu0 0.0
    %50 = vmatpush1.msra.mxu0 %v30
    %51 = vmatprep.subr.mxu0 0.0
    %52 = vmatpush1.msra.mxu0 %v31
    %53 = vmatprep.subr.mxu0 0.0
    %54 = vmatpush1.msra.mxu0 %v32
    %55 = vmatprep.subr.mxu0 0.0
    %56 = vmatpush1.msra.mxu0 %v33
    %57 = vmatprep.subr.mxu0 0.0
    %58 = vmatpush1.msra.mxu0 %v34
    %59 = vmatprep.subr.mxu0 0.0
    %60 = vmatpush1.msra.mxu0 %v35
    %61 = vmatprep.subr.mxu0 0.0
    %62 = vmatpush1.msra.mxu0 %v36
    %63 = vmatprep.subr.mxu0 0.0
    %64 = vmatpush1.msra.mxu0 %v37
    %65 = vmatprep.subr.mxu0 0.0
    %66 = vmatpush1.msra.mxu0 0.0
    %67 = vmatprep.subr.mxu0 0.0
    %68 = vmatpush1.msra.mxu0 0.0
    %69 = vmatprep.subr.mxu0 0.0
    %70 = vmatpush1.msra.mxu0 0.0
    %71 = vmatprep.subr.mxu0 0.0
    %72 = vmatpush1.msra.mxu0 0.0
    %73 = vmatprep.subr.mxu0 0.0
    %74 = vmatpush1.msra.mxu0 0.0
    %75 = vmatprep.subr.mxu0 0.0
    %76 = vmatpush1.msra.mxu0 0.0
    %77 = vmatprep.subr.mxu0 0.0
    %78 = vmatpush1.msra.mxu0 0.0
    %79 = vmatprep.subr.mxu0 0.0
    %80 = vmatpush1.msra.mxu0 0.0
    %81 = vmatprep.subr.mxu0 0.0
    %82 = vmatpush1.msra.mxu0 0.0
    %83 = vmatprep.subr.mxu0 0.0
    %84 = vmatpush1.msra.mxu0 0.0
    %85 = vmatprep.subr.mxu0 0.0
    %86 = vmatpush1.msra.mxu0 0.0
    %87 = vmatprep.subr.mxu0 0.0
    %88 = vmatpush1.msra.mxu0 0.0
    %89 = vmatprep.subr.mxu0 0.0
    %90 = vmatpush1.msra.mxu0 0.0
    %91 = vmatprep.subr.mxu0 0.0
    %92 = vmatpush1.msra.mxu0 0.0
    %93 = vmatprep.subr.mxu0 0.0
    %94 = vmatpush1.msra.mxu0 0.0
    %95 = vmatprep.subr.mxu0 0.0
    %96 = vmatpush1.msra.mxu0 0.0
    %97 = vmatprep.subr.mxu0 0.0
    %98 = vmatpush1.msra.mxu0 0.0
    %99 = vmatprep.subr.mxu0 0.0
    %100 = vmatpush1.msra.mxu0 0.0
    %101 = vmatprep.subr.mxu0 0.0
    %102 = vmatpush1.msra.mxu0 0.0
    %103 = vmatprep.subr.mxu0 0.0
    %104 = vmatpush1.msra.mxu0 0.0
    %105 = vmatprep.subr.mxu0 0.0
    %106 = vmatpush1.msra.mxu0 0.0
    %107 = vmatprep.subr.mxu0 0.0
    %108 = vmatpush1.msra.mxu0 0.0
    %109 = vmatprep.subr.mxu0 0.0
    %110 = vmatpush1.msra.mxu0 0.0
    %111 = vmatprep.subr.mxu0 0.0
    %112 = vmatpush1.msra.mxu0 0.0
    %113 = vmatprep.mubr.f32.mxu0 0.0
    %114 = vmatmul.mubr.f32.gmra.mrb[0].mxu0 %v47
    %v115 = vpop.f32.mrb[0].mxu0
    %v116 = vadd.f32 %v43, %v115
    %v117 = vpop.f32.mrb[0].mxu0
    %118 = vdwg.mxu0
    %v119 = vtanh.pop %v116
    %v120 = vsel %vm28, %v119, 0.0
    %s121 = scalar_lea.vmem %s1, 64
    %v122 = vld [vmem:[%s121] sm:$0xff]
    %v123 = vld [vmem:[%s121 + $0x8] sm:$0xff]
    %v124 = vld [vmem:[%s121 + $0x10] sm:$0xff]
    %v125 = vld [vmem:[%s121 + $0x18] sm:$0xff]
    %v126 = vld [vmem:[%s121 + $0x20] sm:$0xff]
    %v127 = vld [vmem:[%s121 + $0x28] sm:$0xff]
    %v128 = vld [vmem:[%s121 + $0x30] sm:$0xff]
    %v129 = vld [vmem:[%s121 + $0x38] sm:$0xff]
    %s130 = scalar_lea.vmem %s2, 1
    %v131 = vld [vmem:[%s130] sm:$0x1]
    %v133 = vlaneseq
    %v134 = vshrl.u32 %v133, 7
    %v135 = vsub.s32 0, %v134
    %v136 = vrot.slane %v131, %v135
    %v139 = vsel %vm45, %v120, 0
    %141 = vmatprep.subr.mxu0 0.0
    %142 = vmatpush1.msra.mxu0 %v122
    %143 = vmatprep.subr.mxu0 0.0
    %144 = vmatpush1.msra.mxu0 %v123
    %145 = vmatprep.subr.mxu0 0.0
    %146 = vmatpush1.msra.mxu0 %v124
    %147 = vmatprep.subr.mxu0 0.0
    %148 = vmatpush1.msra.mxu0 %v125
    %149 = vmatprep.subr.mxu0 0.0
    %150 = vmatpush1.msra.mxu0 %v126
    %151 = vmatprep.subr.mxu0 0.0
    %152 = vmatpush1.msra.mxu0 %v127
    %153 = vmatprep.subr.mxu0 0.0
    %154 = vmatpush1.msra.mxu0 %v128
    %155 = vmatprep.subr.mxu0 0.0
    %156 = vmatpush1.msra.mxu0 %v129
    %157 = vmatprep.subr.mxu0 0.0
    %158 = vmatpush1.msra.mxu0 0.0
    %159 = vmatprep.subr.mxu0 0.0
    %160 = vmatpush1.msra.mxu0 0.0
    %161 = vmatprep.subr.mxu0 0.0
    %162 = vmatpush1.msra.mxu0 0.0
    %163 = vmatprep.subr.mxu0 0.0
    %164 = vmatpush1.msra.mxu0 0.0
    %165 = vmatprep.subr.mxu0 0.0
    %166 = vmatpush1.msra.mxu0 0.0
    %167 = vmatprep.subr.mxu0 0.0
    %168 = vmatpush1.msra.mxu0 0.0
    %169 = vmatprep.subr.mxu0 0.0
    %170 = vmatpush1.msra.mxu0 0.0
    %171 = vmatprep.subr.mxu0 0.0
    %172 = vmatpush1.msra.mxu0 0.0
    %173 = vmatprep.subr.mxu0 0.0
    %174 = vmatpush1.msra.mxu0 0.0
    %175 = vmatprep.subr.mxu0 0.0
    %176 = vmatpush1.msra.mxu0 0.0
    %177 = vmatprep.subr.mxu0 0.0
    %178 = vmatpush1.msra.mxu0 0.0
    %179 = vmatprep.subr.mxu0 0.0
    %180 = vmatpush1.msra.mxu0 0.0
    %181 = vmatprep.subr.mxu0 0.0
    %182 = vmatpush1.msra.mxu0 0.0
    %183 = vmatprep.subr.mxu0 0.0
    %184 = vmatpush1.msra.mxu0 0.0
    %185 = vmatprep.subr.mxu0 0.0
    %186 = vmatpush1.msra.mxu0 0.0
    %187 = vmatprep.subr.mxu0 0.0
    %188 = vmatpush1.msra.mxu0 0.0
    %189 = vmatprep.subr.mxu0 0.0
    %190 = vmatpush1.msra.mxu0 0.0
    %191 = vmatprep.subr.mxu0 0.0
    %192 = vmatpush1.msra.mxu0 0.0
    %193 = vmatprep.subr.mxu0 0.0
    %194 = vmatpush1.msra.mxu0 0.0
    %195 = vmatprep.subr.mxu0 0.0
    %196 = vmatpush1.msra.mxu0 0.0
    %197 = vmatprep.subr.mxu0 0.0
    %198 = vmatpush1.msra.mxu0 0.0
    %199 = vmatprep.subr.mxu0 0.0
    %200 = vmatpush1.msra.mxu0 0.0
    %201 = vmatprep.subr.mxu0 0.0
    %202 = vmatpush1.msra.mxu0 0.0
    %203 = vmatprep.subr.mxu0 0.0
    %204 = vmatpush1.msra.mxu0 0.0
    %205 = vmatprep.mubr.f32.mxu0 0.0
    %206 = vmatmul.mubr.f32.gmra.mrb[0].mxu0 %v139
    %v207 = vpop.f32.mrb[0].mxu0
    %v208 = vadd.f32 %v136, %v207
    %v209 = vpop.f32.mrb[0].mxu0
    %210 = vdwg.mxu0
    %v211 = vtanh.pop %v208
    %s212 = scalar_lea.vmem %s0, 2
    %v213 = vld [vmem:[%s212] sm:$0x3]
    %215 = vrot.lane.b32.xlu0 %v119, 32
    %v216 = vpop.permute.xlu0 %215
    %v218 = vsel %vm28, %v213, %v216
    %v220 = vsel %vm45, %v218, 0
    %222 = vmatprep.subr.mxu0 0.0
    %223 = vmatpush1.msra.mxu0 %v30
    %224 = vmatprep.subr.mxu0 0.0
    %225 = vmatpush1.msra.mxu0 %v31
    %226 = vmatprep.subr.mxu0 0.0
    %227 = vmatpush1.msra.mxu0 %v32
    %228 = vmatprep.subr.mxu0 0.0
    %229 = vmatpush1.msra.mxu0 %v33
    %230 = vmatprep.subr.mxu0 0.0
    %231 = vmatpush1.msra.mxu0 %v34
    %232 = vmatprep.subr.mxu0 0.0
    %233 = vmatpush1.msra.mxu0 %v35
    %234 = vmatprep.subr.mxu0 0.0
    %235 = vmatpush1.msra.mxu0 %v36
    %236 = vmatprep.subr.mxu0 0.0
    %237 = vmatpush1.msra.mxu0 %v37
    %238 = vmatprep.subr.mxu0 0.0
    %239 = vmatpush1.msra.mxu0 0.0
    %240 = vmatprep.subr.mxu0 0.0
    %241 = vmatpush1.msra.mxu0 0.0
    %242 = vmatprep.subr.mxu0 0.0
    %243 = vmatpush1.msra.mxu0 0.0
    %244 = vmatprep.subr.mxu0 0.0
    %245 = vmatpush1.msra.mxu0 0.0
    %246 = vmatprep.subr.mxu0 0.0
    %247 = vmatpush1.msra.mxu0 0.0
    %248 = vmatprep.subr.mxu0 0.0
    %249 = vmatpush1.msra.mxu0 0.0
    %250 = vmatprep.subr.mxu0 0.0
    %251 = vmatpush1.msra.mxu0 0.0
    %252 = vmatprep.subr.mxu0 0.0
    %253 = vmatpush1.msra.mxu0 0.0
    %254 = vmatprep.subr.mxu0 0.0
    %255 = vmatpush1.msra.mxu0 0.0
    %256 = vmatprep.subr.mxu0 0.0
    %257 = vmatpush1.msra.mxu0 0.0
    %258 = vmatprep.subr.mxu0 0.0
    %259 = vmatpush1.msra.mxu0 0.0
    %260 = vmatprep.subr.mxu0 0.0
    %261 = vmatpush1.msra.mxu0 0.0
    %262 = vmatprep.subr.mxu0 0.0
    %263 = vmatpush1.msra.mxu0 0.0
    %264 = vmatprep.subr.mxu0 0.0
    %265 = vmatpush1.msra.mxu0 0.0
    %266 = vmatprep.subr.mxu0 0.0
    %267 = vmatpush1.msra.mxu0 0.0
    %268 = vmatprep.subr.mxu0 0.0
    %269 = vmatpush1.msra.mxu0 0.0
    %270 = vmatprep.subr.mxu0 0.0
    %271 = vmatpush1.msra.mxu0 0.0
    %272 = vmatprep.subr.mxu0 0.0
    %273 = vmatpush1.msra.mxu0 0.0
    %274 = vmatprep.subr.mxu0 0.0
    %275 = vmatpush1.msra.mxu0 0.0
    %276 = vmatprep.subr.mxu0 0.0
    %277 = vmatpush1.msra.mxu0 0.0
    %278 = vmatprep.subr.mxu0 0.0
    %279 = vmatpush1.msra.mxu0 0.0
    %280 = vmatprep.subr.mxu0 0.0
    %281 = vmatpush1.msra.mxu0 0.0
    %282 = vmatprep.subr.mxu0 0.0
    %283 = vmatpush1.msra.mxu0 0.0
    %284 = vmatprep.subr.mxu0 0.0
    %285 = vmatpush1.msra.mxu0 0.0
    %286 = vmatprep.mubr.f32.mxu0 0.0
    %287 = vmatmul.mubr.f32.gmra.mrb[0].mxu0 %v220
    %v288 = vpop.f32.mrb[0].mxu0
    %v289 = vadd.f32 %v43, %v288
    %v290 = vpop.f32.mrb[0].mxu0
    %291 = vdwg.mxu0
    %v292 = vtanh.pop %v289
    %294 = vrot.lane.b32.xlu0 %v211, 32
    %v295 = vpop.permute.xlu0 %294
    %v297 = vsel %vm28, %v292, %v295
    %v299 = vsel %vm45, %v297, 0
    %301 = vmatprep.subr.mxu0 0.0
    %302 = vmatpush1.msra.mxu0 %v122
    %303 = vmatprep.subr.mxu0 0.0
    %304 = vmatpush1.msra.mxu0 %v123
    %305 = vmatprep.subr.mxu0 0.0
    %306 = vmatpush1.msra.mxu0 %v124
    %307 = vmatprep.subr.mxu0 0.0
    %308 = vmatpush1.msra.mxu0 %v125
    %309 = vmatprep.subr.mxu0 0.0
    %310 = vmatpush1.msra.mxu0 %v126
    %311 = vmatprep.subr.mxu0 0.0
    %312 = vmatpush1.msra.mxu0 %v127
    %313 = vmatprep.subr.mxu0 0.0
    %314 = vmatpush1.msra.mxu0 %v128
    %315 = vmatprep.subr.mxu0 0.0
    %316 = vmatpush1.msra.mxu0 %v129
    %317 = vmatprep.subr.mxu0 0.0
    %318 = vmatpush1.msra.mxu0 0.0
    %319 = vmatprep.subr.mxu0 0.0
    %320 = vmatpush1.msra.mxu0 0.0
    %321 = vmatprep.subr.mxu0 0.0
    %322 = vmatpush1.msra.mxu0 0.0
    %323 = vmatprep.subr.mxu0 0.0
    %324 = vmatpush1.msra.mxu0 0.0
    %325 = vmatprep.subr.mxu0 0.0
    %326 = vmatpush1.msra.mxu0 0.0
    %327 = vmatprep.subr.mxu0 0.0
    %328 = vmatpush1.msra.mxu0 0.0
    %329 = vmatprep.subr.mxu0 0.0
    %330 = vmatpush1.msra.mxu0 0.0
    %331 = vmatprep.subr.mxu0 0.0
    %332 = vmatpush1.msra.mxu0 0.0
    %333 = vmatprep.subr.mxu0 0.0
    %334 = vmatpush1.msra.mxu0 0.0
    %335 = vmatprep.subr.mxu0 0.0
    %336 = vmatpush1.msra.mxu0 0.0
    %337 = vmatprep.subr.mxu0 0.0
    %338 = vmatpush1.msra.mxu0 0.0
    %339 = vmatprep.subr.mxu0 0.0
    %340 = vmatpush1.msra.mxu0 0.0
    %341 = vmatprep.subr.mxu0 0.0
    %342 = vmatpush1.msra.mxu0 0.0
    %343 = vmatprep.subr.mxu0 0.0
    %344 = vmatpush1.msra.mxu0 0.0
    %345 = vmatprep.subr.mxu0 0.0
    %346 = vmatpush1.msra.mxu0 0.0
    %347 = vmatprep.subr.mxu0 0.0
    %348 = vmatpush1.msra.mxu0 0.0
    %349 = vmatprep.subr.mxu0 0.0
    %350 = vmatpush1.msra.mxu0 0.0
    %351 = vmatprep.subr.mxu0 0.0
    %352 = vmatpush1.msra.mxu0 0.0
    %353 = vmatprep.subr.mxu0 0.0
    %354 = vmatpush1.msra.mxu0 0.0
    %355 = vmatprep.subr.mxu0 0.0
    %356 = vmatpush1.msra.mxu0 0.0
    %357 = vmatprep.subr.mxu0 0.0
    %358 = vmatpush1.msra.mxu0 0.0
    %359 = vmatprep.subr.mxu0 0.0
    %360 = vmatpush1.msra.mxu0 0.0
    %361 = vmatprep.subr.mxu0 0.0
    %362 = vmatpush1.msra.mxu0 0.0
    %363 = vmatprep.subr.mxu0 0.0
    %364 = vmatpush1.msra.mxu0 0.0
    %365 = vmatprep.mubr.f32.mxu0 0.0
    %366 = vmatmul.mubr.f32.gmra.mrb[0].mxu0 %v299
    %v367 = vpop.f32.mrb[0].mxu0
    %v368 = vadd.f32 %v136, %v367
    %v369 = vpop.f32.mrb[0].mxu0
    %370 = vdwg.mxu0
    %v371 = vtanh.pop %v368
    %s372 = scalar_lea.vmem %s0, 4
    %v373 = vld [vmem:[%s372] sm:$0x3]
    %375 = vrot.lane.b32.xlu0 %v292, 32
    %v376 = vpop.permute.xlu0 %375
    %v378 = vsel %vm28, %v373, %v376
    %v380 = vsel %vm45, %v378, 0
    %382 = vmatprep.subr.mxu0 0.0
    %383 = vmatpush1.msra.mxu0 %v30
    %384 = vmatprep.subr.mxu0 0.0
    %385 = vmatpush1.msra.mxu0 %v31
    %386 = vmatprep.subr.mxu0 0.0
    %387 = vmatpush1.msra.mxu0 %v32
    %388 = vmatprep.subr.mxu0 0.0
    %389 = vmatpush1.msra.mxu0 %v33
    %390 = vmatprep.subr.mxu0 0.0
    %391 = vmatpush1.msra.mxu0 %v34
    %392 = vmatprep.subr.mxu0 0.0
    %393 = vmatpush1.msra.mxu0 %v35
    %394 = vmatprep.subr.mxu0 0.0
    %395 = vmatpush1.msra.mxu0 %v36
    %396 = vmatprep.subr.mxu0 0.0
    %397 = vmatpush1.msra.mxu0 %v37
    %398 = vmatprep.subr.mxu0 0.0
    %399 = vmatpush1.msra.mxu0 0.0
    %400 = vmatprep.subr.mxu0 0.0
    %401 = vmatpush1.msra.mxu0 0.0
    %402 = vmatprep.subr.mxu0 0.0
    %403 = vmatpush1.msra.mxu0 0.0
    %404 = vmatprep.subr.mxu0 0.0
    %405 = vmatpush1.msra.mxu0 0.0
    %406 = vmatprep.subr.mxu0 0.0
    %407 = vmatpush1.msra.mxu0 0.0
    %408 = vmatprep.subr.mxu0 0.0
    %409 = vmatpush1.msra.mxu0 0.0
    %410 = vmatprep.subr.mxu0 0.0
    %411 = vmatpush1.msra.mxu0 0.0
    %412 = vmatprep.subr.mxu0 0.0
    %413 = vmatpush1.msra.mxu0 0.0
    %414 = vmatprep.subr.mxu0 0.0
    %415 = vmatpush1.msra.mxu0 0.0
    %416 = vmatprep.subr.mxu0 0.0
    %417 = vmatpush1.msra.mxu0 0.0
    %418 = vmatprep.subr.mxu0 0.0
    %419 = vmatpush1.msra.mxu0 0.0
    %420 = vmatprep.subr.mxu0 0.0
    %421 = vmatpush1.msra.mxu0 0.0
    %422 = vmatprep.subr.mxu0 0.0
    %423 = vmatpush1.msra.mxu0 0.0
    %424 = vmatprep.subr.mxu0 0.0
    %425 = vmatpush1.msra.mxu0 0.0
    %426 = vmatprep.subr.mxu0 0.0
    %427 = vmatpush1.msra.mxu0 0.0
    %428 = vmatprep.subr.mxu0 0.0
    %429 = vmatpush1.msra.mxu0 0.0
    %430 = vmatprep.subr.mxu0 0.0
    %431 = vmatpush1.msra.mxu0 0.0
    %432 = vmatprep.subr.mxu0 0.0
    %433 = vmatpush1.msra.mxu0 0.0
    %434 = vmatprep.subr.mxu0 0.0
    %435 = vmatpush1.msra.mxu0 0.0
    %436 = vmatprep.subr.mxu0 0.0
    %437 = vmatpush1.msra.mxu0 0.0
    %438 = vmatprep.subr.mxu0 0.0
    %439 = vmatpush1.msra.mxu0 0.0
    %440 = vmatprep.subr.mxu0 0.0
    %441 = vmatpush1.msra.mxu0 0.0
    %442 = vmatprep.subr.mxu0 0.0
    %443 = vmatpush1.msra.mxu0 0.0
    %444 = vmatprep.subr.mxu0 0.0
    %445 = vmatpush1.msra.mxu0 0.0
    %446 = vmatprep.mubr.f32.mxu0 0.0
    %447 = vmatmul.mubr.f32.gmra.mrb[0].mxu0 %v380
    %v448 = vpop.f32.mrb[0].mxu0
    %v449 = vadd.f32 %v43, %v448
    %v450 = vpop.f32.mrb[0].mxu0
    %451 = vdwg.mxu0
    %v452 = vtanh.pop %v449
    %454 = vrot.lane.b32.xlu0 %v371, 32
    %v455 = vpop.permute.xlu0 %454
    %v457 = vsel %vm28, %v452, %v455
    %v459 = vsel %vm45, %v457, 0
    %461 = vmatprep.subr.mxu0 0.0
    %462 = vmatpush1.msra.mxu0 %v122
    %463 = vmatprep.subr.mxu0 0.0
    %464 = vmatpush1.msra.mxu0 %v123
    %465 = vmatprep.subr.mxu0 0.0
    %466 = vmatpush1.msra.mxu0 %v124
    %467 = vmatprep.subr.mxu0 0.0
    %468 = vmatpush1.msra.mxu0 %v125
    %469 = vmatprep.subr.mxu0 0.0
    %470 = vmatpush1.msra.mxu0 %v126
    %471 = vmatprep.subr.mxu0 0.0
    %472 = vmatpush1.msra.mxu0 %v127
    %473 = vmatprep.subr.mxu0 0.0
    %474 = vmatpush1.msra.mxu0 %v128
    %475 = vmatprep.subr.mxu0 0.0
    %476 = vmatpush1.msra.mxu0 %v129
    %477 = vmatprep.subr.mxu0 0.0
    %478 = vmatpush1.msra.mxu0 0.0
    %479 = vmatprep.subr.mxu0 0.0
    %480 = vmatpush1.msra.mxu0 0.0
    %481 = vmatprep.subr.mxu0 0.0
    %482 = vmatpush1.msra.mxu0 0.0
    %483 = vmatprep.subr.mxu0 0.0
    %484 = vmatpush1.msra.mxu0 0.0
    %485 = vmatprep.subr.mxu0 0.0
    %486 = vmatpush1.msra.mxu0 0.0
    %487 = vmatprep.subr.mxu0 0.0
    %488 = vmatpush1.msra.mxu0 0.0
    %489 = vmatprep.subr.mxu0 0.0
    %490 = vmatpush1.msra.mxu0 0.0
    %491 = vmatprep.subr.mxu0 0.0
    %492 = vmatpush1.msra.mxu0 0.0
    %493 = vmatprep.subr.mxu0 0.0
    %494 = vmatpush1.msra.mxu0 0.0
    %495 = vmatprep.subr.mxu0 0.0
    %496 = vmatpush1.msra.mxu0 0.0
    %497 = vmatprep.subr.mxu0 0.0
    %498 = vmatpush1.msra.mxu0 0.0
    %499 = vmatprep.subr.mxu0 0.0
    %500 = vmatpush1.msra.mxu0 0.0
    %501 = vmatprep.subr.mxu0 0.0
    %502 = vmatpush1.msra.mxu0 0.0
    %503 = vmatprep.subr.mxu0 0.0
    %504 = vmatpush1.msra.mxu0 0.0
    %505 = vmatprep.subr.mxu0 0.0
    %506 = vmatpush1.msra.mxu0 0.0
    %507 = vmatprep.subr.mxu0 0.0
    %508 = vmatpush1.msra.mxu0 0.0
    %509 = vmatprep.subr.mxu0 0.0
    %510 = vmatpush1.msra.mxu0 0.0
    %511 = vmatprep.subr.mxu0 0.0
    %512 = vmatpush1.msra.mxu0 0.0
    %513 = vmatprep.subr.mxu0 0.0
    %514 = vmatpush1.msra.mxu0 0.0
    %515 = vmatprep.subr.mxu0 0.0
    %516 = vmatpush1.msra.mxu0 0.0
    %517 = vmatprep.subr.mxu0 0.0
    %518 = vmatpush1.msra.mxu0 0.0
    %519 = vmatprep.subr.mxu0 0.0
    %520 = vmatpush1.msra.mxu0 0.0
    %521 = vmatprep.subr.mxu0 0.0
    %522 = vmatpush1.msra.mxu0 0.0
    %523 = vmatprep.subr.mxu0 0.0
    %524 = vmatpush1.msra.mxu0 0.0
    %525 = vmatprep.mubr.f32.mxu0 0.0
    %526 = vmatmul.mubr.f32.gmra.mrb[0].mxu0 %v459
    %v527 = vpop.f32.mrb[0].mxu0
    %v528 = vadd.f32 %v136, %v527
    %v529 = vpop.f32.mrb[0].mxu0
    %530 = vdwg.mxu0
    %v531 = vtanh.pop %v528
    %s532 = scalar_lea.vmem %s0, 6
    %v533 = vld [vmem:[%s532] sm:$0x3]
    %535 = vrot.lane.b32.xlu0 %v452, 32
    %v536 = vpop.permute.xlu0 %535
    %v538 = vsel %vm28, %v533, %v536
    %v540 = vsel %vm45, %v538, 0
    %542 = vmatprep.subr.mxu0 0.0
    %543 = vmatpush1.msra.mxu0 %v30
    %544 = vmatprep.subr.mxu0 0.0
    %545 = vmatpush1.msra.mxu0 %v31
    %546 = vmatprep.subr.mxu0 0.0
    %547 = vmatpush1.msra.mxu0 %v32
    %548 = vmatprep.subr.mxu0 0.0
    %549 = vmatpush1.msra.mxu0 %v33
    %550 = vmatprep.subr.mxu0 0.0
    %551 = vmatpush1.msra.mxu0 %v34
    %552 = vmatprep.subr.mxu0 0.0
    %553 = vmatpush1.msra.mxu0 %v35
    %554 = vmatprep.subr.mxu0 0.0
    %555 = vmatpush1.msra.mxu0 %v36
    %556 = vmatprep.subr.mxu0 0.0
    %557 = vmatpush1.msra.mxu0 %v37
    %558 = vmatprep.subr.mxu0 0.0
    %559 = vmatpush1.msra.mxu0 0.0
    %560 = vmatprep.subr.mxu0 0.0
    %561 = vmatpush1.msra.mxu0 0.0
    %562 = vmatprep.subr.mxu0 0.0
    %563 = vmatpush1.msra.mxu0 0.0
    %564 = vmatprep.subr.mxu0 0.0
    %565 = vmatpush1.msra.mxu0 0.0
    %566 = vmatprep.subr.mxu0 0.0
    %567 = vmatpush1.msra.mxu0 0.0
    %568 = vmatprep.subr.mxu0 0.0
    %569 = vmatpush1.msra.mxu0 0.0
    %570 = vmatprep.subr.mxu0 0.0
    %571 = vmatpush1.msra.mxu0 0.0
    %572 = vmatprep.subr.mxu0 0.0
    %573 = vmatpush1.msra.mxu0 0.0
    %574 = vmatprep.subr.mxu0 0.0
    %575 = vmatpush1.msra.mxu0 0.0
    %576 = vmatprep.subr.mxu0 0.0
    %577 = vmatpush1.msra.mxu0 0.0
    %578 = vmatprep.subr.mxu0 0.0
    %579 = vmatpush1.msra.mxu0 0.0
    %580 = vmatprep.subr.mxu0 0.0
    %581 = vmatpush1.msra.mxu0 0.0
    %582 = vmatprep.subr.mxu0 0.0
    %583 = vmatpush1.msra.mxu0 0.0
    %584 = vmatprep.subr.mxu0 0.0
    %585 = vmatpush1.msra.mxu0 0.0
    %586 = vmatprep.subr.mxu0 0.0
    %587 = vmatpush1.msra.mxu0 0.0
    %588 = vmatprep.subr.mxu0 0.0
    %589 = vmatpush1.msra.mxu0 0.0
    %590 = vmatprep.subr.mxu0 0.0
    %591 = vmatpush1.msra.mxu0 0.0
    %592 = vmatprep.subr.mxu0 0.0
    %593 = vmatpush1.msra.mxu0 0.0
    %594 = vmatprep.subr.mxu0 0.0
    %595 = vmatpush1.msra.mxu0 0.0
    %596 = vmatprep.subr.mxu0 0.0
    %597 = vmatpush1.msra.mxu0 0.0
    %598 = vmatprep.subr.mxu0 0.0
    %599 = vmatpush1.msra.mxu0 0.0
    %600 = vmatprep.subr.mxu0 0.0
    %601 = vmatpush1.msra.mxu0 0.0
    %602 = vmatprep.subr.mxu0 0.0
    %603 = vmatpush1.msra.mxu0 0.0
    %604 = vmatprep.subr.mxu0 0.0
    %605 = vmatpush1.msra.mxu0 0.0
    %606 = vmatprep.mubr.f32.mxu0 0.0
    %607 = vmatmul.mubr.f32.gmra.mrb[0].mxu0 %v540
    %v608 = vpop.f32.mrb[0].mxu0
    %v609 = vadd.f32 %v43, %v608
    %v610 = vpop.f32.mrb[0].mxu0
    %611 = vdwg.mxu0
    %v612 = vtanh.pop %v609
    %614 = vrot.lane.b32.xlu0 %v531, 32
    %v615 = vpop.permute.xlu0 %614
    %v617 = vsel %vm28, %v612, %v615
    %v619 = vsel %vm45, %v617, 0
    %621 = vmatprep.subr.mxu0 0.0
    %622 = vmatpush1.msra.mxu0 %v122
    %623 = vmatprep.subr.mxu0 0.0
    %624 = vmatpush1.msra.mxu0 %v123
    %625 = vmatprep.subr.mxu0 0.0
    %626 = vmatpush1.msra.mxu0 %v124
    %627 = vmatprep.subr.mxu0 0.0
    %628 = vmatpush1.msra.mxu0 %v125
    %629 = vmatprep.subr.mxu0 0.0
    %630 = vmatpush1.msra.mxu0 %v126
    %631 = vmatprep.subr.mxu0 0.0
    %632 = vmatpush1.msra.mxu0 %v127
    %633 = vmatprep.subr.mxu0 0.0
    %634 = vmatpush1.msra.mxu0 %v128
    %635 = vmatprep.subr.mxu0 0.0
    %636 = vmatpush1.msra.mxu0 %v129
    %637 = vmatprep.subr.mxu0 0.0
    %638 = vmatpush1.msra.mxu0 0.0
    %639 = vmatprep.subr.mxu0 0.0
    %640 = vmatpush1.msra.mxu0 0.0
    %641 = vmatprep.subr.mxu0 0.0
    %642 = vmatpush1.msra.mxu0 0.0
    %643 = vmatprep.subr.mxu0 0.0
    %644 = vmatpush1.msra.mxu0 0.0
    %645 = vmatprep.subr.mxu0 0.0
    %646 = vmatpush1.msra.mxu0 0.0
    %647 = vmatprep.subr.mxu0 0.0
    %648 = vmatpush1.msra.mxu0 0.0
    %649 = vmatprep.subr.mxu0 0.0
    %650 = vmatpush1.msra.mxu0 0.0
    %651 = vmatprep.subr.mxu0 0.0
    %652 = vmatpush1.msra.mxu0 0.0
    %653 = vmatprep.subr.mxu0 0.0
    %654 = vmatpush1.msra.mxu0 0.0
    %655 = vmatprep.subr.mxu0 0.0
    %656 = vmatpush1.msra.mxu0 0.0
    %657 = vmatprep.subr.mxu0 0.0
    %658 = vmatpush1.msra.mxu0 0.0
    %659 = vmatprep.subr.mxu0 0.0
    %660 = vmatpush1.msra.mxu0 0.0
    %661 = vmatprep.subr.mxu0 0.0
    %662 = vmatpush1.msra.mxu0 0.0
    %663 = vmatprep.subr.mxu0 0.0
    %664 = vmatpush1.msra.mxu0 0.0
    %665 = vmatprep.subr.mxu0 0.0
    %666 = vmatpush1.msra.mxu0 0.0
    %667 = vmatprep.subr.mxu0 0.0
    %668 = vmatpush1.msra.mxu0 0.0
    %669 = vmatprep.subr.mxu0 0.0
    %670 = vmatpush1.msra.mxu0 0.0
    %671 = vmatprep.subr.mxu0 0.0
    %672 = vmatpush1.msra.mxu0 0.0
    %673 = vmatprep.subr.mxu0 0.0
    %674 = vmatpush1.msra.mxu0 0.0
    %675 = vmatprep.subr.mxu0 0.0
    %676 = vmatpush1.msra.mxu0 0.0
    %677 = vmatprep.subr.mxu0 0.0
    %678 = vmatpush1.msra.mxu0 0.0
    %679 = vmatprep.subr.mxu0 0.0
    %680 = vmatpush1.msra.mxu0 0.0
    %681 = vmatprep.subr.mxu0 0.0
    %682 = vmatpush1.msra.mxu0 0.0
    %683 = vmatprep.subr.mxu0 0.0
    %684 = vmatpush1.msra.mxu0 0.0
    %685 = vmatprep.mubr.f32.mxu0 0.0
    %686 = vmatmul.mubr.f32.gmra.mrb[0].mxu0 %v619
    %v687 = vpop.f32.mrb[0].mxu0
    %v688 = vadd.f32 %v136, %v687
    %v689 = vpop.f32.mrb[0].mxu0
    %690 = vdwg.mxu0
    %v691 = vtanh.pop %v688
    %s692 = scalar_lea.vmem %s0, 8
    %v693 = vld [vmem:[%s692] sm:$0x3]
    %695 = vrot.lane.b32.xlu0 %v612, 32
    %v696 = vpop.permute.xlu0 %695
    %v698 = vsel %vm28, %v693, %v696
    %v700 = vsel %vm45, %v698, 0
    %702 = vmatprep.subr.mxu0 0.0
    %703 = vmatpush1.msra.mxu0 %v30
    %704 = vmatprep.subr.mxu0 0.0
    %705 = vmatpush1.msra.mxu0 %v31
    %706 = vmatprep.subr.mxu0 0.0
    %707 = vmatpush1.msra.mxu0 %v32
    %708 = vmatprep.subr.mxu0 0.0
    %709 = vmatpush1.msra.mxu0 %v33
    %710 = vmatprep.subr.mxu0 0.0
    %711 = vmatpush1.msra.mxu0 %v34
    %712 = vmatprep.subr.mxu0 0.0
    %713 = vmatpush1.msra.mxu0 %v35
    %714 = vmatprep.subr.mxu0 0.0
    %715 = vmatpush1.msra.mxu0 %v36
    %716 = vmatprep.subr.mxu0 0.0
    %717 = vmatpush1.msra.mxu0 %v37
    %718 = vmatprep.subr.mxu0 0.0
    %719 = vmatpush1.msra.mxu0 0.0
    %720 = vmatprep.subr.mxu0 0.0
    %721 = vmatpush1.msra.mxu0 0.0
    %722 = vmatprep.subr.mxu0 0.0
    %723 = vmatpush1.msra.mxu0 0.0
    %724 = vmatprep.subr.mxu0 0.0
    %725 = vmatpush1.msra.mxu0 0.0
    %726 = vmatprep.subr.mxu0 0.0
    %727 = vmatpush1.msra.mxu0 0.0
    %728 = vmatprep.subr.mxu0 0.0
    %729 = vmatpush1.msra.mxu0 0.0
    %730 = vmatprep.subr.mxu0 0.0
    %731 = vmatpush1.msra.mxu0 0.0
    %732 = vmatprep.subr.mxu0 0.0
    %733 = vmatpush1.msra.mxu0 0.0
    %734 = vmatprep.subr.mxu0 0.0
    %735 = vmatpush1.msra.mxu0 0.0
    %736 = vmatprep.subr.mxu0 0.0
    %737 = vmatpush1.msra.mxu0 0.0
    %738 = vmatprep.subr.mxu0 0.0
    %739 = vmatpush1.msra.mxu0 0.0
    %740 = vmatprep.subr.mxu0 0.0
    %741 = vmatpush1.msra.mxu0 0.0
    %742 = vmatprep.subr.mxu0 0.0
    %743 = vmatpush1.msra.mxu0 0.0
    %744 = vmatprep.subr.mxu0 0.0
    %745 = vmatpush1.msra.mxu0 0.0
    %746 = vmatprep.subr.mxu0 0.0
    %747 = vmatpush1.msra.mxu0 0.0
    %748 = vmatprep.subr.mxu0 0.0
    %749 = vmatpush1.msra.mxu0 0.0
    %750 = vmatprep.subr.mxu0 0.0
    %751 = vmatpush1.msra.mxu0 0.0
    %752 = vmatprep.subr.mxu0 0.0
    %753 = vmatpush1.msra.mxu0 0.0
    %754 = vmatprep.subr.mxu0 0.0
    %755 = vmatpush1.msra.mxu0 0.0
    %756 = vmatprep.subr.mxu0 0.0
    %757 = vmatpush1.msra.mxu0 0.0
    %758 = vmatprep.subr.mxu0 0.0
    %759 = vmatpush1.msra.mxu0 0.0
    %760 = vmatprep.subr.mxu0 0.0
    %761 = vmatpush1.msra.mxu0 0.0
    %762 = vmatprep.subr.mxu0 0.0
    %763 = vmatpush1.msra.mxu0 0.0
    %764 = vmatprep.subr.mxu0 0.0
    %765 = vmatpush1.msra.mxu0 0.0
    %766 = vmatprep.mubr.f32.mxu0 0.0
    %767 = vmatmul.mubr.f32.gmra.mrb[0].mxu0 %v700
    %v768 = vpop.f32.mrb[0].mxu0
    %v769 = vadd.f32 %v43, %v768
    %v770 = vpop.f32.mrb[0].mxu0
    %771 = vdwg.mxu0
    %v772 = vtanh.pop %v769
    %774 = vrot.lane.b32.xlu0 %v691, 32
    %v775 = vpop.permute.xlu0 %774
    %v777 = vsel %vm28, %v772, %v775
    %v779 = vsel %vm45, %v777, 0
    %781 = vmatprep.subr.mxu0 0.0
    %782 = vmatpush1.msra.mxu0 %v122
    %783 = vmatprep.subr.mxu0 0.0
    %784 = vmatpush1.msra.mxu0 %v123
    %785 = vmatprep.subr.mxu0 0.0
    %786 = vmatpush1.msra.mxu0 %v124
    %787 = vmatprep.subr.mxu0 0.0
    %788 = vmatpush1.msra.mxu0 %v125
    %789 = vmatprep.subr.mxu0 0.0
    %790 = vmatpush1.msra.mxu0 %v126
    %791 = vmatprep.subr.mxu0 0.0
    %792 = vmatpush1.msra.mxu0 %v127
    %793 = vmatprep.subr.mxu0 0.0
    %794 = vmatpush1.msra.mxu0 %v128
    %795 = vmatprep.subr.mxu0 0.0
    %796 = vmatpush1.msra.mxu0 %v129
    %797 = vmatprep.subr.mxu0 0.0
    %798 = vmatpush1.msra.mxu0 0.0
    %799 = vmatprep.subr.mxu0 0.0
    %800 = vmatpush1.msra.mxu0 0.0
    %801 = vmatprep.subr.mxu0 0.0
    %802 = vmatpush1.msra.mxu0 0.0
    %803 = vmatprep.subr.mxu0 0.0
    %804 = vmatpush1.msra.mxu0 0.0
    %805 = vmatprep.subr.mxu0 0.0
    %806 = vmatpush1.msra.mxu0 0.0
    %807 = vmatprep.subr.mxu0 0.0
    %808 = vmatpush1.msra.mxu0 0.0
    %809 = vmatprep.subr.mxu0 0.0
    %810 = vmatpush1.msra.mxu0 0.0
    %811 = vmatprep.subr.mxu0 0.0
    %812 = vmatpush1.msra.mxu0 0.0
    %813 = vmatprep.subr.mxu0 0.0
    %814 = vmatpush1.msra.mxu0 0.0
    %815 = vmatprep.subr.mxu0 0.0
    %816 = vmatpush1.msra.mxu0 0.0
    %817 = vmatprep.subr.mxu0 0.0
    %818 = vmatpush1.msra.mxu0 0.0
    %819 = vmatprep.subr.mxu0 0.0
    %820 = vmatpush1.msra.mxu0 0.0
    %821 = vmatprep.subr.mxu0 0.0
    %822 = vmatpush1.msra.mxu0 0.0
    %823 = vmatprep.subr.mxu0 0.0
    %824 = vmatpush1.msra.mxu0 0.0
    %825 = vmatprep.subr.mxu0 0.0
    %826 = vmatpush1.msra.mxu0 0.0
    %827 = vmatprep.subr.mxu0 0.0
    %828 = vmatpush1.msra.mxu0 0.0
    %829 = vmatprep.subr.mxu0 0.0
    %830 = vmatpush1.msra.mxu0 0.0
    %831 = vmatprep.subr.mxu0 0.0
    %832 = vmatpush1.msra.mxu0 0.0
    %833 = vmatprep.subr.mxu0 0.0
    %834 = vmatpush1.msra.mxu0 0.0
    %835 = vmatprep.subr.mxu0 0.0
    %836 = vmatpush1.msra.mxu0 0.0
    %837 = vmatprep.subr.mxu0 0.0
    %838 = vmatpush1.msra.mxu0 0.0
    %839 = vmatprep.subr.mxu0 0.0
    %840 = vmatpush1.msra.mxu0 0.0
    %841 = vmatprep.subr.mxu0 0.0
    %842 = vmatpush1.msra.mxu0 0.0
    %843 = vmatprep.subr.mxu0 0.0
    %844 = vmatpush1.msra.mxu0 0.0
    %845 = vmatprep.mubr.f32.mxu0 0.0
    %846 = vmatmul.mubr.f32.gmra.mrb[0].mxu0 %v779
    %v847 = vpop.f32.mrb[0].mxu0
    %v848 = vadd.f32 %v136, %v847
    %v849 = vpop.f32.mrb[0].mxu0
    %850 = vdwg.mxu0
    %v851 = vtanh.pop %v848
    %s852 = scalar_lea.vmem %s0, 10
    %v853 = vld [vmem:[%s852] sm:$0x3]
    %855 = vrot.lane.b32.xlu0 %v772, 32
    %v856 = vpop.permute.xlu0 %855
    %v858 = vsel %vm28, %v853, %v856
    %v860 = vsel %vm45, %v858, 0
    %862 = vmatprep.subr.mxu0 0.0
    %863 = vmatpush1.msra.mxu0 %v30
    %864 = vmatprep.subr.mxu0 0.0
    %865 = vmatpush1.msra.mxu0 %v31
    %866 = vmatprep.subr.mxu0 0.0
    %867 = vmatpush1.msra.mxu0 %v32
    %868 = vmatprep.subr.mxu0 0.0
    %869 = vmatpush1.msra.mxu0 %v33
    %870 = vmatprep.subr.mxu0 0.0
    %871 = vmatpush1.msra.mxu0 %v34
    %872 = vmatprep.subr.mxu0 0.0
    %873 = vmatpush1.msra.mxu0 %v35
    %874 = vmatprep.subr.mxu0 0.0
    %875 = vmatpush1.msra.mxu0 %v36
    %876 = vmatprep.subr.mxu0 0.0
    %877 = vmatpush1.msra.mxu0 %v37
    %878 = vmatprep.subr.mxu0 0.0
    %879 = vmatpush1.msra.mxu0 0.0
    %880 = vmatprep.subr.mxu0 0.0
    %881 = vmatpush1.msra.mxu0 0.0
    %882 = vmatprep.subr.mxu0 0.0
    %883 = vmatpush1.msra.mxu0 0.0
    %884 = vmatprep.subr.mxu0 0.0
    %885 = vmatpush1.msra.mxu0 0.0
    %886 = vmatprep.subr.mxu0 0.0
    %887 = vmatpush1.msra.mxu0 0.0
    %888 = vmatprep.subr.mxu0 0.0
    %889 = vmatpush1.msra.mxu0 0.0
    %890 = vmatprep.subr.mxu0 0.0
    %891 = vmatpush1.msra.mxu0 0.0
    %892 = vmatprep.subr.mxu0 0.0
    %893 = vmatpush1.msra.mxu0 0.0
    %894 = vmatprep.subr.mxu0 0.0
    %895 = vmatpush1.msra.mxu0 0.0
    %896 = vmatprep.subr.mxu0 0.0
    %897 = vmatpush1.msra.mxu0 0.0
    %898 = vmatprep.subr.mxu0 0.0
    %899 = vmatpush1.msra.mxu0 0.0
    %900 = vmatprep.subr.mxu0 0.0
    %901 = vmatpush1.msra.mxu0 0.0
    %902 = vmatprep.subr.mxu0 0.0
    %903 = vmatpush1.msra.mxu0 0.0
    %904 = vmatprep.subr.mxu0 0.0
    %905 = vmatpush1.msra.mxu0 0.0
    %906 = vmatprep.subr.mxu0 0.0
    %907 = vmatpush1.msra.mxu0 0.0
    %908 = vmatprep.subr.mxu0 0.0
    %909 = vmatpush1.msra.mxu0 0.0
    %910 = vmatprep.subr.mxu0 0.0
    %911 = vmatpush1.msra.mxu0 0.0
    %912 = vmatprep.subr.mxu0 0.0
    %913 = vmatpush1.msra.mxu0 0.0
    %914 = vmatprep.subr.mxu0 0.0
    %915 = vmatpush1.msra.mxu0 0.0
    %916 = vmatprep.subr.mxu0 0.0
    %917 = vmatpush1.msra.mxu0 0.0
    %918 = vmatprep.subr.mxu0 0.0
    %919 = vmatpush1.msra.mxu0 0.0
    %920 = vmatprep.subr.mxu0 0.0
    %921 = vmatpush1.msra.mxu0 0.0
    %922 = vmatprep.subr.mxu0 0.0
    %923 = vmatpush1.msra.mxu0 0.0
    %924 = vmatprep.subr.mxu0 0.0
    %925 = vmatpush1.msra.mxu0 0.0
    %926 = vmatprep.mubr.f32.mxu0 0.0
    %927 = vmatmul.mubr.f32.gmra.mrb[0].mxu0 %v860
    %v928 = vpop.f32.mrb[0].mxu0
    %v929 = vadd.f32 %v43, %v928
    %v930 = vpop.f32.mrb[0].mxu0
    %931 = vdwg.mxu0
    %v932 = vtanh.pop %v929
    %934 = vrot.lane.b32.xlu0 %v851, 32
    %v935 = vpop.permute.xlu0 %934
    %v937 = vsel %vm28, %v932, %v935
    %v939 = vsel %vm45, %v937, 0
    %941 = vmatprep.subr.mxu0 0.0
    %942 = vmatpush1.msra.mxu0 %v122
    %943 = vmatprep.subr.mxu0 0.0
    %944 = vmatpush1.msra.mxu0 %v123
    %945 = vmatprep.subr.mxu0 0.0
    %946 = vmatpush1.msra.mxu0 %v124
    %947 = vmatprep.subr.mxu0 0.0
    %948 = vmatpush1.msra.mxu0 %v125
    %949 = vmatprep.subr.mxu0 0.0
    %950 = vmatpush1.msra.mxu0 %v126
    %951 = vmatprep.subr.mxu0 0.0
    %952 = vmatpush1.msra.mxu0 %v127
    %953 = vmatprep.subr.mxu0 0.0
    %954 = vmatpush1.msra.mxu0 %v128
    %955 = vmatprep.subr.mxu0 0.0
    %956 = vmatpush1.msra.mxu0 %v129
    %957 = vmatprep.subr.mxu0 0.0
    %958 = vmatpush1.msra.mxu0 0.0
    %959 = vmatprep.subr.mxu0 0.0
    %960 = vmatpush1.msra.mxu0 0.0
    %961 = vmatprep.subr.mxu0 0.0
    %962 = vmatpush1.msra.mxu0 0.0
    %963 = vmatprep.subr.mxu0 0.0
    %964 = vmatpush1.msra.mxu0 0.0
    %965 = vmatprep.subr.mxu0 0.0
    %966 = vmatpush1.msra.mxu0 0.0
    %967 = vmatprep.subr.mxu0 0.0
    %968 = vmatpush1.msra.mxu0 0.0
    %969 = vmatprep.subr.mxu0 0.0
    %970 = vmatpush1.msra.mxu0 0.0
    %971 = vmatprep.subr.mxu0 0.0
    %972 = vmatpush1.msra.mxu0 0.0
    %973 = vmatprep.subr.mxu0 0.0
    %974 = vmatpush1.msra.mxu0 0.0
    %975 = vmatprep.subr.mxu0 0.0
    %976 = vmatpush1.msra.mxu0 0.0
    %977 = vmatprep.subr.mxu0 0.0
    %978 = vmatpush1.msra.mxu0 0.0
    %979 = vmatprep.subr.mxu0 0.0
    %980 = vmatpush1.msra.mxu0 0.0
    %981 = vmatprep.subr.mxu0 0.0
    %982 = vmatpush1.msra.mxu0 0.0
    %983 = vmatprep.subr.mxu0 0.0
    %984 = vmatpush1.msra.mxu0 0.0
    %985 = vmatprep.subr.mxu0 0.0
    %986 = vmatpush1.msra.mxu0 0.0
    %987 = vmatprep.subr.mxu0 0.0
    %988 = vmatpush1.msra.mxu0 0.0
    %989 = vmatprep.subr.mxu0 0.0
    %990 = vmatpush1.msra.mxu0 0.0
    %991 = vmatprep.subr.mxu0 0.0
    %992 = vmatpush1.msra.mxu0 0.0
    %993 = vmatprep.subr.mxu0 0.0
    %994 = vmatpush1.msra.mxu0 0.0
    %995 = vmatprep.subr.mxu0 0.0
    %996 = vmatpush1.msra.mxu0 0.0
    %997 = vmatprep.subr.mxu0 0.0
    %998 = vmatpush1.msra.mxu0 0.0
    %999 = vmatprep.subr.mxu0 0.0
    %1000 = vmatpush1.msra.mxu0 0.0
    %1001 = vmatprep.subr.mxu0 0.0
    %1002 = vmatpush1.msra.mxu0 0.0
    %1003 = vmatprep.subr.mxu0 0.0
    %1004 = vmatpush1.msra.mxu0 0.0
    %1005 = vmatprep.mubr.f32.mxu0 0.0
    %1006 = vmatmul.mubr.f32.gmra.mrb[0].mxu0 %v939
    %v1007 = vpop.f32.mrb[0].mxu0
    %v1008 = vadd.f32 %v136, %v1007
    %v1009 = vpop.f32.mrb[0].mxu0
    %1010 = vdwg.mxu0
    %v1011 = vtanh.pop %v1008
    %s1012 = scalar_lea.vmem %s0, 12
    %v1013 = vld [vmem:[%s1012] sm:$0x3]
    %1015 = vrot.lane.b32.xlu0 %v932, 32
    %v1016 = vpop.permute.xlu0 %1015
    %v1018 = vsel %vm28, %v1013, %v1016
    %v1020 = vsel %vm45, %v1018, 0
    %1022 = vmatprep.subr.mxu0 0.0
    %1023 = vmatpush1.msra.mxu0 %v30
    %1024 = vmatprep.subr.mxu0 0.0
    %1025 = vmatpush1.msra.mxu0 %v31
    %1026 = vmatprep.subr.mxu0 0.0
    %1027 = vmatpush1.msra.mxu0 %v32
    %1028 = vmatprep.subr.mxu0 0.0
    %1029 = vmatpush1.msra.mxu0 %v33
    %1030 = vmatprep.subr.mxu0 0.0
    %1031 = vmatpush1.msra.mxu0 %v34
    %1032 = vmatprep.subr.mxu0 0.0
    %1033 = vmatpush1.msra.mxu0 %v35
    %1034 = vmatprep.subr.mxu0 0.0
    %1035 = vmatpush1.msra.mxu0 %v36
    %1036 = vmatprep.subr.mxu0 0.0
    %1037 = vmatpush1.msra.mxu0 %v37
    %1038 = vmatprep.subr.mxu0 0.0
    %1039 = vmatpush1.msra.mxu0 0.0
    %1040 = vmatprep.subr.mxu0 0.0
    %1041 = vmatpush1.msra.mxu0 0.0
    %1042 = vmatprep.subr.mxu0 0.0
    %1043 = vmatpush1.msra.mxu0 0.0
    %1044 = vmatprep.subr.mxu0 0.0
    %1045 = vmatpush1.msra.mxu0 0.0
    %1046 = vmatprep.subr.mxu0 0.0
    %1047 = vmatpush1.msra.mxu0 0.0
    %1048 = vmatprep.subr.mxu0 0.0
    %1049 = vmatpush1.msra.mxu0 0.0
    %1050 = vmatprep.subr.mxu0 0.0
    %1051 = vmatpush1.msra.mxu0 0.0
    %1052 = vmatprep.subr.mxu0 0.0
    %1053 = vmatpush1.msra.mxu0 0.0
    %1054 = vmatprep.subr.mxu0 0.0
    %1055 = vmatpush1.msra.mxu0 0.0
    %1056 = vmatprep.subr.mxu0 0.0
    %1057 = vmatpush1.msra.mxu0 0.0
    %1058 = vmatprep.subr.mxu0 0.0
    %1059 = vmatpush1.msra.mxu0 0.0
    %1060 = vmatprep.subr.mxu0 0.0
    %1061 = vmatpush1.msra.mxu0 0.0
    %1062 = vmatprep.subr.mxu0 0.0
    %1063 = vmatpush1.msra.mxu0 0.0
    %1064 = vmatprep.subr.mxu0 0.0
    %1065 = vmatpush1.msra.mxu0 0.0
    %1066 = vmatprep.subr.mxu0 0.0
    %1067 = vmatpush1.msra.mxu0 0.0
    %1068 = vmatprep.subr.mxu0 0.0
    %1069 = vmatpush1.msra.mxu0 0.0
    %1070 = vmatprep.subr.mxu0 0.0
    %1071 = vmatpush1.msra.mxu0 0.0
    %1072 = vmatprep.subr.mxu0 0.0
    %1073 = vmatpush1.msra.mxu0 0.0
    %1074 = vmatprep.subr.mxu0 0.0
    %1075 = vmatpush1.msra.mxu0 0.0
    %1076 = vmatprep.subr.mxu0 0.0
    %1077 = vmatpush1.msra.mxu0 0.0
    %1078 = vmatprep.subr.mxu0 0.0
    %1079 = vmatpush1.msra.mxu0 0.0
    %1080 = vmatprep.subr.mxu0 0.0
    %1081 = vmatpush1.msra.mxu0 0.0
    %1082 = vmatprep.subr.mxu0 0.0
    %1083 = vmatpush1.msra.mxu0 0.0
    %1084 = vmatprep.subr.mxu0 0.0
    %1085 = vmatpush1.msra.mxu0 0.0
    %1086 = vmatprep.mubr.f32.mxu0 0.0
    %1087 = vmatmul.mubr.f32.gmra.mrb[0].mxu0 %v1020
    %v1088 = vpop.f32.mrb[0].mxu0
    %v1089 = vadd.f32 %v43, %v1088
    %v1090 = vpop.f32.mrb[0].mxu0
    %1091 = vdwg.mxu0
    %v1092 = vtanh.pop %v1089
    %1094 = vrot.lane.b32.xlu0 %v1011, 32
    %v1095 = vpop.permute.xlu0 %1094
    %v1097 = vsel %vm28, %v1092, %v1095
    %v1099 = vsel %vm45, %v1097, 0
    %1101 = vmatprep.subr.mxu0 0.0
    %1102 = vmatpush1.msra.mxu0 %v122
    %1103 = vmatprep.subr.mxu0 0.0
    %1104 = vmatpush1.msra.mxu0 %v123
    %1105 = vmatprep.subr.mxu0 0.0
    %1106 = vmatpush1.msra.mxu0 %v124
    %1107 = vmatprep.subr.mxu0 0.0
    %1108 = vmatpush1.msra.mxu0 %v125
    %1109 = vmatprep.subr.mxu0 0.0
    %1110 = vmatpush1.msra.mxu0 %v126
    %1111 = vmatprep.subr.mxu0 0.0
    %1112 = vmatpush1.msra.mxu0 %v127
    %1113 = vmatprep.subr.mxu0 0.0
    %1114 = vmatpush1.msra.mxu0 %v128
    %1115 = vmatprep.subr.mxu0 0.0
    %1116 = vmatpush1.msra.mxu0 %v129
    %1117 = vmatprep.subr.mxu0 0.0
    %1118 = vmatpush1.msra.mxu0 0.0
    %1119 = vmatprep.subr.mxu0 0.0
    %1120 = vmatpush1.msra.mxu0 0.0
    %1121 = vmatprep.subr.mxu0 0.0
    %1122 = vmatpush1.msra.mxu0 0.0
    %1123 = vmatprep.subr.mxu0 0.0
    %1124 = vmatpush1.msra.mxu0 0.0
    %1125 = vmatprep.subr.mxu0 0.0
    %1126 = vmatpush1.msra.mxu0 0.0
    %1127 = vmatprep.subr.mxu0 0.0
    %1128 = vmatpush1.msra.mxu0 0.0
    %1129 = vmatprep.subr.mxu0 0.0
    %1130 = vmatpush1.msra.mxu0 0.0
    %1131 = vmatprep.subr.mxu0 0.0
    %1132 = vmatpush1.msra.mxu0 0.0
    %1133 = vmatprep.subr.mxu0 0.0
    %1134 = vmatpush1.msra.mxu0 0.0
    %1135 = vmatprep.subr.mxu0 0.0
    %1136 = vmatpush1.msra.mxu0 0.0
    %1137 = vmatprep.subr.mxu0 0.0
    %1138 = vmatpush1.msra.mxu0 0.0
    %1139 = vmatprep.subr.mxu0 0.0
    %1140 = vmatpush1.msra.mxu0 0.0
    %1141 = vmatprep.subr.mxu0 0.0
    %1142 = vmatpush1.msra.mxu0 0.0
    %1143 = vmatprep.subr.mxu0 0.0
    %1144 = vmatpush1.msra.mxu0 0.0
    %1145 = vmatprep.subr.mxu0 0.0
    %1146 = vmatpush1.msra.mxu0 0.0
    %1147 = vmatprep.subr.mxu0 0.0
    %1148 = vmatpush1.msra.mxu0 0.0
    %1149 = vmatprep.subr.mxu0 0.0
    %1150 = vmatpush1.msra.mxu0 0.0
    %1151 = vmatprep.subr.mxu0 0.0
    %1152 = vmatpush1.msra.mxu0 0.0
    %1153 = vmatprep.subr.mxu0 0.0
    %1154 = vmatpush1.msra.mxu0 0.0
    %1155 = vmatprep.subr.mxu0 0.0
    %1156 = vmatpush1.msra.mxu0 0.0
    %1157 = vmatprep.subr.mxu0 0.0
    %1158 = vmatpush1.msra.mxu0 0.0
    %1159 = vmatprep.subr.mxu0 0.0
    %1160 = vmatpush1.msra.mxu0 0.0
    %1161 = vmatprep.subr.mxu0 0.0
    %1162 = vmatpush1.msra.mxu0 0.0
    %1163 = vmatprep.subr.mxu0 0.0
    %1164 = vmatpush1.msra.mxu0 0.0
    %1165 = vmatprep.mubr.f32.mxu0 0.0
    %1166 = vmatmul.mubr.f32.gmra.mrb[0].mxu0 %v1099
    %v1167 = vpop.f32.mrb[0].mxu0
    %v1168 = vadd.f32 %v136, %v1167
    %v1169 = vpop.f32.mrb[0].mxu0
    %1170 = vdwg.mxu0
    %v1171 = vtanh.pop %v1168
    %s1172 = scalar_lea.vmem %s0, 14
    %v1173 = vld [vmem:[%s1172] sm:$0x3]
    %1175 = vrot.lane.b32.xlu0 %v1092, 32
    %v1176 = vpop.permute.xlu0 %1175
    %v1178 = vsel %vm28, %v1173, %v1176
    %v1180 = vsel %vm45, %v1178, 0
    %1182 = vmatprep.subr.mxu0 0.0
    %1183 = vmatpush1.msra.mxu0 %v30
    %1184 = vmatprep.subr.mxu0 0.0
    %1185 = vmatpush1.msra.mxu0 %v31
    %1186 = vmatprep.subr.mxu0 0.0
    %1187 = vmatpush1.msra.mxu0 %v32
    %1188 = vmatprep.subr.mxu0 0.0
    %1189 = vmatpush1.msra.mxu0 %v33
    %1190 = vmatprep.subr.mxu0 0.0
    %1191 = vmatpush1.msra.mxu0 %v34
    %1192 = vmatprep.subr.mxu0 0.0
    %1193 = vmatpush1.msra.mxu0 %v35
    %1194 = vmatprep.subr.mxu0 0.0
    %1195 = vmatpush1.msra.mxu0 %v36
    %1196 = vmatprep.subr.mxu0 0.0
    %1197 = vmatpush1.msra.mxu0 %v37
    %1198 = vmatprep.subr.mxu0 0.0
    %1199 = vmatpush1.msra.mxu0 0.0
    %1200 = vmatprep.subr.mxu0 0.0
    %1201 = vmatpush1.msra.mxu0 0.0
    %1202 = vmatprep.subr.mxu0 0.0
    %1203 = vmatpush1.msra.mxu0 0.0
    %1204 = vmatprep.subr.mxu0 0.0
    %1205 = vmatpush1.msra.mxu0 0.0
    %1206 = vmatprep.subr.mxu0 0.0
    %1207 = vmatpush1.msra.mxu0 0.0
    %1208 = vmatprep.subr.mxu0 0.0
    %1209 = vmatpush1.msra.mxu0 0.0
    %1210 = vmatprep.subr.mxu0 0.0
    %1211 = vmatpush1.msra.mxu0 0.0
    %1212 = vmatprep.subr.mxu0 0.0
    %1213 = vmatpush1.msra.mxu0 0.0
    %1214 = vmatprep.subr.mxu0 0.0
    %1215 = vmatpush1.msra.mxu0 0.0
    %1216 = vmatprep.subr.mxu0 0.0
    %1217 = vmatpush1.msra.mxu0 0.0
    %1218 = vmatprep.subr.mxu0 0.0
    %1219 = vmatpush1.msra.mxu0 0.0
    %1220 = vmatprep.subr.mxu0 0.0
    %1221 = vmatpush1.msra.mxu0 0.0
    %1222 = vmatprep.subr.mxu0 0.0
    %1223 = vmatpush1.msra.mxu0 0.0
    %1224 = vmatprep.subr.mxu0 0.0
    %1225 = vmatpush1.msra.mxu0 0.0
    %1226 = vmatprep.subr.mxu0 0.0
    %1227 = vmatpush1.msra.mxu0 0.0
    %1228 = vmatprep.subr.mxu0 0.0
    %1229 = vmatpush1.msra.mxu0 0.0
    %1230 = vmatprep.subr.mxu0 0.0
    %1231 = vmatpush1.msra.mxu0 0.0
    %1232 = vmatprep.subr.mxu0 0.0
    %1233 = vmatpush1.msra.mxu0 0.0
    %1234 = vmatprep.subr.mxu0 0.0
    %1235 = vmatpush1.msra.mxu0 0.0
    %1236 = vmatprep.subr.mxu0 0.0
    %1237 = vmatpush1.msra.mxu0 0.0
    %1238 = vmatprep.subr.mxu0 0.0
    %1239 = vmatpush1.msra.mxu0 0.0
    %1240 = vmatprep.subr.mxu0 0.0
    %1241 = vmatpush1.msra.mxu0 0.0
    %1242 = vmatprep.subr.mxu0 0.0
    %1243 = vmatpush1.msra.mxu0 0.0
    %1244 = vmatprep.subr.mxu0 0.0
    %1245 = vmatpush1.msra.mxu0 0.0
    %1246 = vmatprep.mubr.f32.mxu0 0.0
    %1247 = vmatmul.mubr.f32.gmra.mrb[0].mxu0 %v1180
    %v1248 = vpop.f32.mrb[0].mxu0
    %v1249 = vadd.f32 %v43, %v1248
    %v1250 = vpop.f32.mrb[0].mxu0
    %1251 = vdwg.mxu0
    %v1252 = vtanh.pop %v1249
    %1254 = vrot.lane.b32.xlu0 %v1171, 32
    %v1255 = vpop.permute.xlu0 %1254
    %v1257 = vsel %vm28, %v1252, %v1255
    %v1259 = vsel %vm45, %v1257, 0
    %1261 = vmatprep.subr.mxu0 0.0
    %1262 = vmatpush1.msra.mxu0 %v122
    %1263 = vmatprep.subr.mxu0 0.0
    %1264 = vmatpush1.msra.mxu0 %v123
    %1265 = vmatprep.subr.mxu0 0.0
    %1266 = vmatpush1.msra.mxu0 %v124
    %1267 = vmatprep.subr.mxu0 0.0
    %1268 = vmatpush1.msra.mxu0 %v125
    %1269 = vmatprep.subr.mxu0 0.0
    %1270 = vmatpush1.msra.mxu0 %v126
    %1271 = vmatprep.subr.mxu0 0.0
    %1272 = vmatpush1.msra.mxu0 %v127
    %1273 = vmatprep.subr.mxu0 0.0
    %1274 = vmatpush1.msra.mxu0 %v128
    %1275 = vmatprep.subr.mxu0 0.0
    %1276 = vmatpush1.msra.mxu0 %v129
    %1277 = vmatprep.subr.mxu0 0.0
    %1278 = vmatpush1.msra.mxu0 0.0
    %1279 = vmatprep.subr.mxu0 0.0
    %1280 = vmatpush1.msra.mxu0 0.0
    %1281 = vmatprep.subr.mxu0 0.0
    %1282 = vmatpush1.msra.mxu0 0.0
    %1283 = vmatprep.subr.mxu0 0.0
    %1284 = vmatpush1.msra.mxu0 0.0
    %1285 = vmatprep.subr.mxu0 0.0
    %1286 = vmatpush1.msra.mxu0 0.0
    %1287 = vmatprep.subr.mxu0 0.0
    %1288 = vmatpush1.msra.mxu0 0.0
    %1289 = vmatprep.subr.mxu0 0.0
    %1290 = vmatpush1.msra.mxu0 0.0
    %1291 = vmatprep.subr.mxu0 0.0
    %1292 = vmatpush1.msra.mxu0 0.0
    %1293 = vmatprep.subr.mxu0 0.0
    %1294 = vmatpush1.msra.mxu0 0.0
    %1295 = vmatprep.subr.mxu0 0.0
    %1296 = vmatpush1.msra.mxu0 0.0
    %1297 = vmatprep.subr.mxu0 0.0
    %1298 = vmatpush1.msra.mxu0 0.0
    %1299 = vmatprep.subr.mxu0 0.0
    %1300 = vmatpush1.msra.mxu0 0.0
    %1301 = vmatprep.subr.mxu0 0.0
    %1302 = vmatpush1.msra.mxu0 0.0
    %1303 = vmatprep.subr.mxu0 0.0
    %1304 = vmatpush1.msra.mxu0 0.0
    %1305 = vmatprep.subr.mxu0 0.0
    %1306 = vmatpush1.msra.mxu0 0.0
    %1307 = vmatprep.subr.mxu0 0.0
    %1308 = vmatpush1.msra.mxu0 0.0
    %1309 = vmatprep.subr.mxu0 0.0
    %1310 = vmatpush1.msra.mxu0 0.0
    %1311 = vmatprep.subr.mxu0 0.0
    %1312 = vmatpush1.msra.mxu0 0.0
    %1313 = vmatprep.subr.mxu0 0.0
    %1314 = vmatpush1.msra.mxu0 0.0
    %1315 = vmatprep.subr.mxu0 0.0
    %1316 = vmatpush1.msra.mxu0 0.0
    %1317 = vmatprep.subr.mxu0 0.0
    %1318 = vmatpush1.msra.mxu0 0.0
    %1319 = vmatprep.subr.mxu0 0.0
    %1320 = vmatpush1.msra.mxu0 0.0
    %1321 = vmatprep.subr.mxu0 0.0
    %1322 = vmatpush1.msra.mxu0 0.0
    %1323 = vmatprep.subr.mxu0 0.0
    %1324 = vmatpush1.msra.mxu0 0.0
    %1325 = vmatprep.mubr.f32.mxu0 0.0
    %1326 = vmatmul.mubr.f32.gmra.mrb[0].mxu0 %v1259
    %v1327 = vpop.f32.mrb[0].mxu0
    %v1328 = vadd.f32 %v136, %v1327
    %v1329 = vpop.f32.mrb[0].mxu0
    %1330 = vdwg.mxu0
    %v1331 = vtanh.pop %v1328
    %v1332 = vld [vmem:[%s3] sm:$0xff]
    %v1333 = vld [vmem:[%s3 + $0x8] sm:$0xff]
    %v1334 = vld [vmem:[%s3 + $0x10] sm:$0xff]
    %v1335 = vld [vmem:[%s3 + $0x18] sm:$0xff]
    %v1336 = vld [vmem:[%s4] sm:$0x1]
    %v1338 = vlaneseq
    %v1339 = vshrl.u32 %v1338, 7
    %v1340 = vsub.s32 0, %v1339
    %v1341 = vrot.slane %v1336, %v1340
    %v1344 = vsel %vm28, %v1331, 0
    %1346 = vmatprep.subr.mxu0 0.0
    %1347 = vmatpush1.msra.mxu0 %v1332
    %1348 = vmatprep.subr.mxu0 0.0
    %1349 = vmatpush1.msra.mxu0 %v1333
    %1350 = vmatprep.subr.mxu0 0.0
    %1351 = vmatpush1.msra.mxu0 %v1334
    %1352 = vmatprep.subr.mxu0 0.0
    %1353 = vmatpush1.msra.mxu0 %v1335
    %1354 = vmatprep.subr.mxu0 0.0
    %1355 = vmatpush1.msra.mxu0 0.0
    %1356 = vmatprep.subr.mxu0 0.0
    %1357 = vmatpush1.msra.mxu0 0.0
    %1358 = vmatprep.subr.mxu0 0.0
    %1359 = vmatpush1.msra.mxu0 0.0
    %1360 = vmatprep.subr.mxu0 0.0
    %1361 = vmatpush1.msra.mxu0 0.0
    %1362 = vmatprep.subr.mxu0 0.0
    %1363 = vmatpush1.msra.mxu0 0.0
    %1364 = vmatprep.subr.mxu0 0.0
    %1365 = vmatpush1.msra.mxu0 0.0
    %1366 = vmatprep.subr.mxu0 0.0
    %1367 = vmatpush1.msra.mxu0 0.0
    %1368 = vmatprep.subr.mxu0 0.0
    %1369 = vmatpush1.msra.mxu0 0.0
    %1370 = vmatprep.subr.mxu0 0.0
    %1371 = vmatpush1.msra.mxu0 0.0
    %1372 = vmatprep.subr.mxu0 0.0
    %1373 = vmatpush1.msra.mxu0 0.0
    %1374 = vmatprep.subr.mxu0 0.0
    %1375 = vmatpush1.msra.mxu0 0.0
    %1376 = vmatprep.subr.mxu0 0.0
    %1377 = vmatpush1.msra.mxu0 0.0
    %1378 = vmatprep.subr.mxu0 0.0
    %1379 = vmatpush1.msra.mxu0 0.0
    %1380 = vmatprep.subr.mxu0 0.0
    %1381 = vmatpush1.msra.mxu0 0.0
    %1382 = vmatprep.subr.mxu0 0.0
    %1383 = vmatpush1.msra.mxu0 0.0
    %1384 = vmatprep.subr.mxu0 0.0
    %1385 = vmatpush1.msra.mxu0 0.0
    %1386 = vmatprep.subr.mxu0 0.0
    %1387 = vmatpush1.msra.mxu0 0.0
    %1388 = vmatprep.subr.mxu0 0.0
    %1389 = vmatpush1.msra.mxu0 0.0
    %1390 = vmatprep.subr.mxu0 0.0
    %1391 = vmatpush1.msra.mxu0 0.0
    %1392 = vmatprep.subr.mxu0 0.0
    %1393 = vmatpush1.msra.mxu0 0.0
    %1394 = vmatprep.subr.mxu0 0.0
    %1395 = vmatpush1.msra.mxu0 0.0
    %1396 = vmatprep.subr.mxu0 0.0
    %1397 = vmatpush1.msra.mxu0 0.0
    %1398 = vmatprep.subr.mxu0 0.0
    %1399 = vmatpush1.msra.mxu0 0.0
    %1400 = vmatprep.subr.mxu0 0.0
    %1401 = vmatpush1.msra.mxu0 0.0
    %1402 = vmatprep.subr.mxu0 0.0
    %1403 = vmatpush1.msra.mxu0 0.0
    %1404 = vmatprep.subr.mxu0 0.0
    %1405 = vmatpush1.msra.mxu0 0.0
    %1406 = vmatprep.subr.mxu0 0.0
    %1407 = vmatpush1.msra.mxu0 0.0
    %1408 = vmatprep.subr.mxu0 0.0
    %1409 = vmatpush1.msra.mxu0 0.0
    %1410 = vmatprep.mubr.f32.mxu0 0.0
    %1411 = vmatmul.mubr.f32.gmra.mrb[0].mxu0 %v1344
    %v1412 = vpop.f32.mrb[0].mxu0
    %v1413 = vadd.f32 %v1341, %v1412
    %v1414 = vpop.f32.mrb[0].mxu0
    %1415 = vdwg.mxu0
    %v1416 = vmax.f32 %v1413, 0.0
    %v1417 = vld [vmem:[%s5] sm:$0xff]
    %v1418 = vld [vmem:[%s5 + $0x8] sm:$0xff]
    %v1419 = vld [vmem:[%s5 + $0x10] sm:$0xff]
    %v1420 = vld [vmem:[%s5 + $0x18] sm:$0xff]
    %v1421 = vld [vmem:[%s5 + $0x20] sm:$0xff]
    %v1422 = vld [vmem:[%s5 + $0x28] sm:$0xff]
    %v1423 = vld [vmem:[%s5 + $0x30] sm:$0xff]
    %v1424 = vld [vmem:[%s5 + $0x38] sm:$0xff]
    %v1425 = vld [vmem:[%s6] sm:$0x1]
    %v1427 = vlaneseq
    %v1428 = vshrl.u32 %v1427, 7
    %v1429 = vsub.s32 0, %v1428
    %v1430 = vrot.slane %v1425, %v1429
    %v1433 = vsel %vm45, %v1416, 0
    %1435 = vmatprep.subr.mxu0 0.0
    %1436 = vmatpush1.msra.mxu0 %v1417
    %1437 = vmatprep.subr.mxu0 0.0
    %1438 = vmatpush1.msra.mxu0 %v1418
    %1439 = vmatprep.subr.mxu0 0.0
    %1440 = vmatpush1.msra.mxu0 %v1419
    %1441 = vmatprep.subr.mxu0 0.0
    %1442 = vmatpush1.msra.mxu0 %v1420
    %1443 = vmatprep.subr.mxu0 0.0
    %1444 = vmatpush1.msra.mxu0 %v1421
    %1445 = vmatprep.subr.mxu0 0.0
    %1446 = vmatpush1.msra.mxu0 %v1422
    %1447 = vmatprep.subr.mxu0 0.0
    %1448 = vmatpush1.msra.mxu0 %v1423
    %1449 = vmatprep.subr.mxu0 0.0
    %1450 = vmatpush1.msra.mxu0 %v1424
    %1451 = vmatprep.subr.mxu0 0.0
    %1452 = vmatpush1.msra.mxu0 0.0
    %1453 = vmatprep.subr.mxu0 0.0
    %1454 = vmatpush1.msra.mxu0 0.0
    %1455 = vmatprep.subr.mxu0 0.0
    %1456 = vmatpush1.msra.mxu0 0.0
    %1457 = vmatprep.subr.mxu0 0.0
    %1458 = vmatpush1.msra.mxu0 0.0
    %1459 = vmatprep.subr.mxu0 0.0
    %1460 = vmatpush1.msra.mxu0 0.0
    %1461 = vmatprep.subr.mxu0 0.0
    %1462 = vmatpush1.msra.mxu0 0.0
    %1463 = vmatprep.subr.mxu0 0.0
    %1464 = vmatpush1.msra.mxu0 0.0
    %1465 = vmatprep.subr.mxu0 0.0
    %1466 = vmatpush1.msra.mxu0 0.0
    %1467 = vmatprep.subr.mxu0 0.0
    %1468 = vmatpush1.msra.mxu0 0.0
    %1469 = vmatprep.subr.mxu0 0.0
    %1470 = vmatpush1.msra.mxu0 0.0
    %1471 = vmatprep.subr.mxu0 0.0
    %1472 = vmatpush1.msra.mxu0 0.0
    %1473 = vmatprep.subr.mxu0 0.0
    %1474 = vmatpush1.msra.mxu0 0.0
    %1475 = vmatprep.subr.mxu0 0.0
    %1476 = vmatpush1.msra.mxu0 0.0
    %1477 = vmatprep.subr.mxu0 0.0
    %1478 = vmatpush1.msra.mxu0 0.0
    %1479 = vmatprep.subr.mxu0 0.0
    %1480 = vmatpush1.msra.mxu0 0.0
    %1481 = vmatprep.subr.mxu0 0.0
    %1482 = vmatpush1.msra.mxu0 0.0
    %1483 = vmatprep.subr.mxu0 0.0
    %1484 = vmatpush1.msra.mxu0 0.0
    %1485 = vmatprep.subr.mxu0 0.0
    %1486 = vmatpush1.msra.mxu0 0.0
    %1487 = vmatprep.subr.mxu0 0.0
    %1488 = vmatpush1.msra.mxu0 0.0
    %1489 = vmatprep.subr.mxu0 0.0
    %1490 = vmatpush1.msra.mxu0 0.0
    %1491 = vmatprep.subr.mxu0 0.0
    %1492 = vmatpush1.msra.mxu0 0.0
    %1493 = vmatprep.subr.mxu0 0.0
    %1494 = vmatpush1.msra.mxu0 0.0
    %1495 = vmatprep.subr.mxu0 0.0
    %1496 = vmatpush1.msra.mxu0 0.0
    %1497 = vmatprep.subr.mxu0 0.0
    %1498 = vmatpush1.msra.mxu0 0.0
    %1499 = vmatprep.mubr.f32.mxu0 0.0
    %1500 = vmatmul.mubr.f32.gmra.mrb[0].mxu0 %v1433
    %v1501 = vpop.f32.mrb[0].mxu0
    %v1502 = vadd.f32 %v1430, %v1501
    %v1503 = vpop.f32.mrb[0].mxu0
    %1504 = vdwg.mxu0
    %1505 = vst [vmem:[#allocation2] sm:$0x3] %v1502
    // Predicated region
    $region30: #{tpu_custom_call.1} parent=1 // pred_check
      _
    $region31: #{tpu_custom_call.1} parent=1 // pred_check_branch
      %1507 = sbr.rel (0) target = $region33
    $region32: #{tpu_custom_call.1} parent=1 // pred_region
      %s1509 = ssub.s32 32, 32
      %1510 = vsyncadd [#allocation3], %s1509
      %s1512 = sshll.u32 [#allocation2], 4
      %s1513 = int_to_ptr.vmem [resolvable:$true] %s1512
      %1515 = dma.vmem_to_hbm [thread:$0]  %s1513, 32, %s7, [#allocation3]
    $region33: #{tpu_custom_call.1} parent=1 // pred_fallthru
      _
    // Predicated region
    $region34: #{tpu_custom_call.1} parent=1 // pred_check
      _
    $region35: #{tpu_custom_call.1} parent=1 // pred_check_branch
      %1517 = sbr.rel (0) target = $region37
    $region36: #{tpu_custom_call.1} parent=1 // pred_region
      %1518 = dma.done [#allocation3], 32
    $region37: #{tpu_custom_call.1} parent=1 // pred_fallthru
      _
    %1519 = vsyncpa [#allocation3], 1

</llo_original>
